<compile_context>
chip_gen: v7x
topology: tpu7x:2x2x1
jax: 0.10.0
libtpu: 0.0.40
codegen_flags: <defaults>
</compile_context>

<pallas_src>
import jax
import jax.numpy as jnp
from jax.experimental import pallas as pl
from jax.experimental.pallas import tpu as pltpu

NCP = 128  # classes padded to one full lane tile so the logits store is lane-dense / unmasked


# ----------------------------------------------------------------------------
# Fused kernel: one batch tile = 3 lane-dense MXU matmuls + weight-normed FC head
# ----------------------------------------------------------------------------
def _fused_classifier_kernel(xr_ref, w0_ref, b0_ref, w1_ref, b1_ref,
                             w2_ref, b2_ref, wh_ref, bh_ref,
                             out_ref, z3_ref):
    tn, ncp = out_ref.shape              # (TN, 128)
    n3 = wh_ref.shape[0]

    # FGL layer 0 (C_in == 1): block-mean over blk0 inputs + channel mix, one MXU dot
    z1 = jnp.dot(xr_ref[...], w0_ref[...],
                 preferred_element_type=jnp.float32) + b0_ref[...]      # (TN*n3, blk2*blk1*C1)
    # FGL layer 1: mean over blk1 sub-nodes + channel mix (folded into w1)
    z2 = jnp.dot(z1, w1_ref[...],
                 preferred_element_type=jnp.float32) + b1_ref[...]      # (TN*n3, blk2*C2)
    # FGL layer 2: mean over blk2 sub-nodes + channel mix -> keep in VMEM scratch
    z3_ref[...] = jnp.dot(z2, w2_ref[...],
                          preferred_element_type=jnp.float32) + b2_ref[...]   # (TN*n3, C3)

    # Weight-normed FC head: accumulate n3 per-node dots into one lane-dense (TN,128) tile.
    acc = jnp.zeros((tn, ncp), jnp.float32)
    for v in range(n3):                                   # static unroll (n3 is small)
        rows_v = z3_ref[pl.ds(v, tn, stride=n3), :]       # node v across all samples in tile
        acc = acc + jnp.dot(rows_v, wh_ref[v], preferred_element_type=jnp.float32)
    out_ref[...] = acc + bh_ref[...]                      # single full-lane store


# ----------------------------------------------------------------------------
# One-time parameter preparation (hoisted out of the per-call path)
# ----------------------------------------------------------------------------
def prepare_params(params, study_idx, node_sizes, channel_sizes, nclasses):
    n0, n1, n2, n3 = node_sizes
    c1, c2, c3 = channel_sizes[1:]
    assert channel_sizes[0] == 1
    assert n0 % n1 == 0 and n1 % n2 == 0 and n2 % n3 == 0   # groups never straddle samples
    blk0, blk1, blk2 = n0 // n1, n1 // n2, n2 // n3
    p01 = blk1 * blk2                                       # n1-nodes per n3-node

    w0 = params["fgl0"]["w_eff"]                            # (C1, 1)
    w1 = params["fgl1"]["w_eff"]                            # (C2, C1)
    w2 = params["fgl2"]["w_eff"]                            # (C3, C2)
    head = params[f"fc{study_idx}"]

    # layer 0: rank-1 (blk0, C1) mean+mix block (1/blk0 folded), block-diag over p01 n1-nodes
    w0_blk = jnp.ones((blk0, 1), jnp.float32) @ w0.reshape(1, c1) / blk0
    w0_bd = jnp.kron(jnp.eye(p01, dtype=jnp.float32), w0_blk)            # (n0/n3, p01*C1)
    b0_t = jnp.tile(params["fgl0"]["b"].reshape(1, c1), (1, p01))
    # layer 1: blk1-stacked w1^T (1/blk1 folded), block-diag over blk2 n2-nodes
    w1_stk = jnp.tile(w1.T, (blk1, 1)) / blk1                            # (blk1*C1, C2)
    w1_bd = jnp.kron(jnp.eye(blk2, dtype=jnp.float32), w1_stk)           # (p01*C1, blk2*C2)
    b1_t = jnp.tile(params["fgl1"]["b"].reshape(1, c2), (1, blk2))
    # layer 2: blk2-stacked w2^T (1/blk2 folded)
    w2_stk = jnp.tile(w2.T, (blk2, 1)) / blk2                            # (blk2*C2, C3)
    b2_r = params["fgl2"]["b"].reshape(1, c3)
    # head: torch .view(N,-1) feature order is f = c*n3 + v -> per-node (C3, ncls) slabs,
    # classes zero-padded to 128 lanes
    wh = head["w_eff"].reshape(nclasses, c3, n3).transpose(2, 1, 0)      # (n3, C3, ncls)
    wh_p = jnp.zeros((n3, c3, NCP), jnp.float32).at[:, :, :nclasses].set(wh)
    bh_p = jnp.zeros((1, NCP), jnp.float32).at[:, :nclasses].set(head["b"].reshape(1, -1))

    return dict(w0=w0_bd, b0=b0_t, w1=w1_bd, b1=b1_t, w2=w2_stk, b2=b2_r,
                wh=wh_p, bh=bh_p,
                dims=(n0, n1, n2, n3, c1, c2, c3, nclasses))


# ----------------------------------------------------------------------------
# Forward wrapper: batch-tiled, pipelined pallas_call
# ----------------------------------------------------------------------------
def smaller_classifier_forward(prep, x, tile_n):
    n0, n1, n2, n3, c1, c2, c3, nclasses = prep["dims"]
    N = x.shape[0]
    assert x.shape[1] == n0 and N % tile_n == 0
    k0 = n0 // n3                           # input lanes per (sample, n3-node) row
    f1 = (n1 // n3) * c1                    # z1 lanes
    f2 = (n2 // n3) * c2                    # z2 lanes
    rows_t = tile_n * n3                    # rows per batch tile

    xr = x.reshape(N * n3, k0)              # free (contiguous) view of x

    grid_spec = pltpu.PrefetchScalarGridSpec(
        num_scalar_prefetch=0,
        grid=(N // tile_n,),
        in_specs=[
            pl.BlockSpec((rows_t, k0), lambda i: (i, 0)),       # x tile (pipelined per step)
            pl.BlockSpec((k0, f1), lambda i: (0, 0)),           # weights: same block every step
            pl.BlockSpec((1, f1), lambda i: (0, 0)),
            pl.BlockSpec((f1, f2), lambda i: (0, 0)),
            pl.BlockSpec((1, f2), lambda i: (0, 0)),
            pl.BlockSpec((f2, c3), lambda i: (0, 0)),
            pl.BlockSpec((1, c3), lambda i: (0, 0)),
            pl.BlockSpec((n3, c3, NCP), lambda i: (0, 0, 0)),
            pl.BlockSpec((1, NCP), lambda i: (0, 0)),
        ],
        out_specs=pl.BlockSpec((tile_n, NCP), lambda i: (i, 0)),
        scratch_shapes=[pltpu.VMEM((rows_t, c3), jnp.float32)],  # z3 (per-node head reads)
    )
    out_pad = pl.pallas_call(
        _fused_classifier_kernel,
        out_shape=jax.ShapeDtypeStruct((N, NCP), jnp.float32),
        grid_spec=grid_spec,
        compiler_params=pltpu.CompilerParams(
            dimension_semantics=("parallel",),       # batch tiles split across v7x's 2 TCs
            vmem_limit_bytes=32 * 1024 * 1024,       # size tile_n against v7x's 64 MiB VMEM
        ),
    )(xr, prep["w0"], prep["b0"], prep["w1"], prep["b1"],
      prep["w2"], prep["b2"], prep["wh"], prep["bh"])
    return out_pad[:, :nclasses]


# ----------------------------------------------------------------------------
# Synthetic, deterministic parameter construction
# ----------------------------------------------------------------------------
def weight_norm_effective(v, g):
    """PyTorch weight_norm: W = g * V / ||V||, norm over all dims except dim 0."""
    norm = jnp.sqrt(jnp.sum(v * v, axis=tuple(range(1, v.ndim)), keepdims=True))
    return g.reshape((-1,) + (1,) * (v.ndim - 1)) * v / norm


def make_block_adjacency(n_out, n_in):
    """Ward-tree-style adjacency (reference only): contiguous blocks, row-normalized (mean)."""
    assert n_in % n_out == 0
    blk = n_in // n_out
    rows = jnp.arange(n_in) // blk
    a_t = (rows[:, None] == jnp.arange(n_out)[None, :]).astype(jnp.float32)
    return a_t / jnp.float32(blk)


def init_params(key, node_sizes, channel_sizes, nclasses):
    params = {}
    keys = jax.random.split(key, 16)
    ki = 0
    for i in range(3):
        c_in, c_out = channel_sizes[i], channel_sizes[i + 1]
        n_in, n_out = node_sizes[i], node_sizes[i + 1]
        v = jax.random.normal(keys[ki], (c_out, c_in), jnp.float32) * 0.1; ki += 1
        g = jnp.ones((c_out,), jnp.float32) + 0.01 * jnp.arange(c_out, dtype=jnp.float32)
        b = jax.random.normal(keys[ki], (c_out,), jnp.float32) * 0.01; ki += 1
        params[f"fgl{i}"] = dict(
            w_eff=weight_norm_effective(v, g), b=b,
            a_t=make_block_adjacency(n_out, n_in))          # used only by the reference
    feat = node_sizes[-1] * channel_sizes[-1]
    v = jax.random.normal(keys[ki], (nclasses, feat), jnp.float32) * 0.05; ki += 1
    g = jnp.ones((nclasses,), jnp.float32)
    b = jax.random.normal(keys[ki], (nclasses,), jnp.float32) * 0.01; ki += 1
    params["fc0"] = dict(w_eff=weight_norm_effective(v, g), b=b)
    return params


# ----------------------------------------------------------------------------
# Main
# ----------------------------------------------------------------------------
if __name__ == "__main__":
    # Small, structurally consistent shapes (original: nodes [nnz,1024,256,32],
    # channels [1,32,64,128]); scaled down.
    node_sizes = [512, 128, 32, 8]
    channel_sizes = [1, 32, 64, 128]
    nclasses = 10
    N, TN = 16, 8                            # batch of 16 -> two pipelined batch tiles

    key = jax.random.PRNGKey(0)
    k_param, k_x = jax.random.split(key)
    params = init_params(k_param, node_sizes, channel_sizes, nclasses)

    x = jax.random.normal(k_x, (N, node_sizes[0]), jnp.float32)
    study_vec = jnp.zeros((N,), jnp.int32)
    study_idx = int(study_vec[0])            # mirrors study_vec[0].item() head selection (host-side)

    prep = prepare_params(params, study_idx, node_sizes, channel_sizes, nclasses)
    out = smaller_classifier_forward(prep, x, TN)
    out = jax.block_until_ready(out)

    # Pure-JAX reference on the original (N, C, nodes) layout with dense adjacency —
    # independent check of the folded block-diagonal / stacked weight construction.
    def ref_forward(params, x):
        z = x[:, None, :]                                    # unsqueeze(1)
        for i in range(3):
            p = params[f"fgl{i}"]
            agg = jnp.einsum("ncu,uv->ncv", z, p["a_t"])
            z = jnp.einsum("oc,ncv->nov", p["w_eff"], agg) + p["b"][None, :, None]
        flat = z.reshape(z.shape[0], -1)                     # torch .view(N, -1) order
        h = params["fc0"]
        return flat @ h["w_eff"].T + h["b"][None, :]

    ref = ref_forward(params, x)
    assert out.shape == (N, nclasses)
    assert jnp.allclose(out, ref, atol=2e-4, rtol=2e-4), float(jnp.max(jnp.abs(out - ref)))

    print("KERNEL_OK")
</pallas_src>

<mosaic_0001>
module attributes {stable_mosaic.version = 11 : i64} {
  func.func @_fused_classifier_kernel(%arg0: i32, %arg1: memref<64x64xf32, #tpu.memory_space<vmem>>, %arg2: memref<64x512xf32, #tpu.memory_space<vmem>>, %arg3: memref<1x512xf32, #tpu.memory_space<vmem>>, %arg4: memref<512x256xf32, #tpu.memory_space<vmem>>, %arg5: memref<1x256xf32, #tpu.memory_space<vmem>>, %arg6: memref<256x128xf32, #tpu.memory_space<vmem>>, %arg7: memref<1x128xf32, #tpu.memory_space<vmem>>, %arg8: memref<8x128x128xf32, #tpu.memory_space<vmem>>, %arg9: memref<1x128xf32, #tpu.memory_space<vmem>>, %arg10: memref<8x128xf32, #tpu.memory_space<vmem>>, %arg11: memref<64x128xf32, #tpu.memory_space<vmem>>) attributes {dimension_semantics = [#tpu.dimension_semantics<parallel>], iteration_bounds = array<i64: 2>, scalar_prefetch = 0 : i64, scratch_operands = 1 : i64, tpu.core_type = #tpu.core_type<tc>, window_params = [{transform_indices = @transform_0, window_bounds = array<i64: 64, 64>}, {pipeline_mode = #tpu.pipeline_mode<synchronous>, transform_indices = @transform_1, window_bounds = array<i64: 64, 512>}, {pipeline_mode = #tpu.pipeline_mode<synchronous>, transform_indices = @transform_2, window_bounds = array<i64: 1, 512>}, {pipeline_mode = #tpu.pipeline_mode<synchronous>, transform_indices = @transform_3, window_bounds = array<i64: 512, 256>}, {pipeline_mode = #tpu.pipeline_mode<synchronous>, transform_indices = @transform_4, window_bounds = array<i64: 1, 256>}, {pipeline_mode = #tpu.pipeline_mode<synchronous>, transform_indices = @transform_5, window_bounds = array<i64: 256, 128>}, {pipeline_mode = #tpu.pipeline_mode<synchronous>, transform_indices = @transform_6, window_bounds = array<i64: 1, 128>}, {pipeline_mode = #tpu.pipeline_mode<synchronous>, transform_indices = @transform_7, window_bounds = array<i64: 8, 128, 128>}, {pipeline_mode = #tpu.pipeline_mode<synchronous>, transform_indices = @transform_8, window_bounds = array<i64: 1, 128>}, {transform_indices = @transform_9, window_bounds = array<i64: 8, 128>}]} {
    %c0 = arith.constant 0 : index
    %c0_0 = arith.constant 0 : index
    %0 = vector.load %arg1[%c0, %c0_0] : memref<64x64xf32, #tpu.memory_space<vmem>>, vector<64x64xf32>
    %c0_1 = arith.constant 0 : index
    %c0_2 = arith.constant 0 : index
    %1 = vector.load %arg2[%c0_1, %c0_2] : memref<64x512xf32, #tpu.memory_space<vmem>>, vector<64x512xf32>
    %cst = arith.constant dense<0.000000e+00> : vector<64x512xf32>
    %2 = tpu.matmul %0, %1, %cst {dimension_numbers = #tpu.dot_dimension_numbers<[1], [0], [0], [1], [0, 0, 1, 1], [], []>} : vector<64x64xf32>, vector<64x512xf32>, vector<64x512xf32> -> vector<64x512xf32>
    %c0_3 = arith.constant 0 : index
    %c0_4 = arith.constant 0 : index
    %3 = vector.load %arg3[%c0_3, %c0_4] : memref<1x512xf32, #tpu.memory_space<vmem>>, vector<1x512xf32>
    %4 = vector.broadcast %3 : vector<1x512xf32> to vector<64x512xf32>
    %5 = arith.addf %2, %4 : vector<64x512xf32>
    %c0_5 = arith.constant 0 : index
    %c0_6 = arith.constant 0 : index
    %6 = vector.load %arg4[%c0_5, %c0_6] : memref<512x256xf32, #tpu.memory_space<vmem>>, vector<512x256xf32>
    %cst_7 = arith.constant dense<0.000000e+00> : vector<64x256xf32>
    %7 = tpu.matmul %5, %6, %cst_7 {dimension_numbers = #tpu.dot_dimension_numbers<[1], [0], [0], [1], [0, 0, 1, 1], [], []>} : vector<64x512xf32>, vector<512x256xf32>, vector<64x256xf32> -> vector<64x256xf32>
    %c0_8 = arith.constant 0 : index
    %c0_9 = arith.constant 0 : index
    %8 = vector.load %arg5[%c0_8, %c0_9] : memref<1x256xf32, #tpu.memory_space<vmem>>, vector<1x256xf32>
    %9 = vector.broadcast %8 : vector<1x256xf32> to vector<64x256xf32>
    %10 = arith.addf %7, %9 : vector<64x256xf32>
    %c0_10 = arith.constant 0 : index
    %c0_11 = arith.constant 0 : index
    %11 = vector.load %arg6[%c0_10, %c0_11] : memref<256x128xf32, #tpu.memory_space<vmem>>, vector<256x128xf32>
    %cst_12 = arith.constant dense<0.000000e+00> : vector<64x128xf32>
    %12 = tpu.matmul %10, %11, %cst_12 {dimension_numbers = #tpu.dot_dimension_numbers<[1], [0], [0], [1], [0, 0, 1, 1], [], []>} : vector<64x256xf32>, vector<256x128xf32>, vector<64x128xf32> -> vector<64x128xf32>
    %c0_13 = arith.constant 0 : index
    %c0_14 = arith.constant 0 : index
    %13 = vector.load %arg7[%c0_13, %c0_14] : memref<1x128xf32, #tpu.memory_space<vmem>>, vector<1x128xf32>
    %14 = vector.broadcast %13 : vector<1x128xf32> to vector<64x128xf32>
    %15 = arith.addf %12, %14 : vector<64x128xf32>
    %c0_15 = arith.constant 0 : index
    %c0_16 = arith.constant 0 : index
    %16 = vector.load %arg11[%c0_15, %c0_16] : memref<64x128xf32, #tpu.memory_space<vmem>>, vector<64x128xf32>
    tpu.vector_store %arg11[%c0_15, %c0_16], %15 {strides = array<i32>} : memref<64x128xf32, #tpu.memory_space<vmem>>, vector<64x128xf32>,
    %cst_17 = arith.constant 0.000000e+00 : f32
    %17 = vector.broadcast %cst_17 : f32 to vector<8x128xf32>
    %c0_18 = arith.constant 0 : index
    %c0_19 = arith.constant 0 : index
    %18 = tpu.strided_load %arg11[%c0_18, %c0_19] {strides = array<i32: 8, 1>} : memref<64x128xf32, #tpu.memory_space<vmem>>, vector<8x128xf32>
    %c0_20 = arith.constant 0 : index
    %c0_21 = arith.constant 0 : index
    %c0_22 = arith.constant 0 : index
    %19 = vector.load %arg8[%c0_20, %c0_21, %c0_22] : memref<8x128x128xf32, #tpu.memory_space<vmem>>, vector<1x128x128xf32>
    %20 = vector.shape_cast %19 : vector<1x128x128xf32> to vector<128x128xf32>
    %cst_23 = arith.constant dense<0.000000e+00> : vector<8x128xf32>
    %21 = tpu.matmul %18, %20, %cst_23 {dimension_numbers = #tpu.dot_dimension_numbers<[1], [0], [0], [1], [0, 0, 1, 1], [], []>} : vector<8x128xf32>, vector<128x128xf32>, vector<8x128xf32> -> vector<8x128xf32>
    %22 = arith.addf %17, %21 : vector<8x128xf32>
    %c1 = arith.constant 1 : index
    %c0_24 = arith.constant 0 : index
    %23 = tpu.strided_load %arg11[%c1, %c0_24] {strides = array<i32: 8, 1>} : memref<64x128xf32, #tpu.memory_space<vmem>>, vector<8x128xf32>
    %c1_25 = arith.constant 1 : index
    %c0_26 = arith.constant 0 : index
    %c0_27 = arith.constant 0 : index
    %24 = vector.load %arg8[%c1_25, %c0_26, %c0_27] : memref<8x128x128xf32, #tpu.memory_space<vmem>>, vector<1x128x128xf32>
    %25 = vector.shape_cast %24 : vector<1x128x128xf32> to vector<128x128xf32>
    %cst_28 = arith.constant dense<0.000000e+00> : vector<8x128xf32>
    %26 = tpu.matmul %23, %25, %cst_28 {dimension_numbers = #tpu.dot_dimension_numbers<[1], [0], [0], [1], [0, 0, 1, 1], [], []>} : vector<8x128xf32>, vector<128x128xf32>, vector<8x128xf32> -> vector<8x128xf32>
    %27 = arith.addf %22, %26 : vector<8x128xf32>
    %c2 = arith.constant 2 : index
    %c0_29 = arith.constant 0 : index
    %28 = tpu.strided_load %arg11[%c2, %c0_29] {strides = array<i32: 8, 1>} : memref<64x128xf32, #tpu.memory_space<vmem>>, vector<8x128xf32>
    %c2_30 = arith.constant 2 : index
    %c0_31 = arith.constant 0 : index
    %c0_32 = arith.constant 0 : index
    %29 = vector.load %arg8[%c2_30, %c0_31, %c0_32] : memref<8x128x128xf32, #tpu.memory_space<vmem>>, vector<1x128x128xf32>
    %30 = vector.shape_cast %29 : vector<1x128x128xf32> to vector<128x128xf32>
    %cst_33 = arith.constant dense<0.000000e+00> : vector<8x128xf32>
    %31 = tpu.matmul %28, %30, %cst_33 {dimension_numbers = #tpu.dot_dimension_numbers<[1], [0], [0], [1], [0, 0, 1, 1], [], []>} : vector<8x128xf32>, vector<128x128xf32>, vector<8x128xf32> -> vector<8x128xf32>
    %32 = arith.addf %27, %31 : vector<8x128xf32>
    %c3 = arith.constant 3 : index
    %c0_34 = arith.constant 0 : index
    %33 = tpu.strided_load %arg11[%c3, %c0_34] {strides = array<i32: 8, 1>} : memref<64x128xf32, #tpu.memory_space<vmem>>, vector<8x128xf32>
    %c3_35 = arith.constant 3 : index
    %c0_36 = arith.constant 0 : index
    %c0_37 = arith.constant 0 : index
    %34 = vector.load %arg8[%c3_35, %c0_36, %c0_37] : memref<8x128x128xf32, #tpu.memory_space<vmem>>, vector<1x128x128xf32>
    %35 = vector.shape_cast %34 : vector<1x128x128xf32> to vector<128x128xf32>
    %cst_38 = arith.constant dense<0.000000e+00> : vector<8x128xf32>
    %36 = tpu.matmul %33, %35, %cst_38 {dimension_numbers = #tpu.dot_dimension_numbers<[1], [0], [0], [1], [0, 0, 1, 1], [], []>} : vector<8x128xf32>, vector<128x128xf32>, vector<8x128xf32> -> vector<8x128xf32>
    %37 = arith.addf %32, %36 : vector<8x128xf32>
    %c4 = arith.constant 4 : index
    %c0_39 = arith.constant 0 : index
    %38 = tpu.strided_load %arg11[%c4, %c0_39] {strides = array<i32: 8, 1>} : memref<64x128xf32, #tpu.memory_space<vmem>>, vector<8x128xf32>
    %c4_40 = arith.constant 4 : index
    %c0_41 = arith.constant 0 : index
    %c0_42 = arith.constant 0 : index
    %39 = vector.load %arg8[%c4_40, %c0_41, %c0_42] : memref<8x128x128xf32, #tpu.memory_space<vmem>>, vector<1x128x128xf32>
    %40 = vector.shape_cast %39 : vector<1x128x128xf32> to vector<128x128xf32>
    %cst_43 = arith.constant dense<0.000000e+00> : vector<8x128xf32>
    %41 = tpu.matmul %38, %40, %cst_43 {dimension_numbers = #tpu.dot_dimension_numbers<[1], [0], [0], [1], [0, 0, 1, 1], [], []>} : vector<8x128xf32>, vector<128x128xf32>, vector<8x128xf32> -> vector<8x128xf32>
    %42 = arith.addf %37, %41 : vector<8x128xf32>
    %c5 = arith.constant 5 : index
    %c0_44 = arith.constant 0 : index
    %43 = tpu.strided_load %arg11[%c5, %c0_44] {strides = array<i32: 8, 1>} : memref<64x128xf32, #tpu.memory_space<vmem>>, vector<8x128xf32>
    %c5_45 = arith.constant 5 : index
    %c0_46 = arith.constant 0 : index
    %c0_47 = arith.constant 0 : index
    %44 = vector.load %arg8[%c5_45, %c0_46, %c0_47] : memref<8x128x128xf32, #tpu.memory_space<vmem>>, vector<1x128x128xf32>
    %45 = vector.shape_cast %44 : vector<1x128x128xf32> to vector<128x128xf32>
    %cst_48 = arith.constant dense<0.000000e+00> : vector<8x128xf32>
    %46 = tpu.matmul %43, %45, %cst_48 {dimension_numbers = #tpu.dot_dimension_numbers<[1], [0], [0], [1], [0, 0, 1, 1], [], []>} : vector<8x128xf32>, vector<128x128xf32>, vector<8x128xf32> -> vector<8x128xf32>
    %47 = arith.addf %42, %46 : vector<8x128xf32>
    %c6 = arith.constant 6 : index
    %c0_49 = arith.constant 0 : index
    %48 = tpu.strided_load %arg11[%c6, %c0_49] {strides = array<i32: 8, 1>} : memref<64x128xf32, #tpu.memory_space<vmem>>, vector<8x128xf32>
    %c6_50 = arith.constant 6 : index
    %c0_51 = arith.constant 0 : index
    %c0_52 = arith.constant 0 : index
    %49 = vector.load %arg8[%c6_50, %c0_51, %c0_52] : memref<8x128x128xf32, #tpu.memory_space<vmem>>, vector<1x128x128xf32>
    %50 = vector.shape_cast %49 : vector<1x128x128xf32> to vector<128x128xf32>
    %cst_53 = arith.constant dense<0.000000e+00> : vector<8x128xf32>
    %51 = tpu.matmul %48, %50, %cst_53 {dimension_numbers = #tpu.dot_dimension_numbers<[1], [0], [0], [1], [0, 0, 1, 1], [], []>} : vector<8x128xf32>, vector<128x128xf32>, vector<8x128xf32> -> vector<8x128xf32>
    %52 = arith.addf %47, %51 : vector<8x128xf32>
    %c7 = arith.constant 7 : index
    %c0_54 = arith.constant 0 : index
    %53 = tpu.strided_load %arg11[%c7, %c0_54] {strides = array<i32: 8, 1>} : memref<64x128xf32, #tpu.memory_space<vmem>>, vector<8x128xf32>
    %c7_55 = arith.constant 7 : index
    %c0_56 = arith.constant 0 : index
    %c0_57 = arith.constant 0 : index
    %54 = vector.load %arg8[%c7_55, %c0_56, %c0_57] : memref<8x128x128xf32, #tpu.memory_space<vmem>>, vector<1x128x128xf32>
    %55 = vector.shape_cast %54 : vector<1x128x128xf32> to vector<128x128xf32>
    %cst_58 = arith.constant dense<0.000000e+00> : vector<8x128xf32>
    %56 = tpu.matmul %53, %55, %cst_58 {dimension_numbers = #tpu.dot_dimension_numbers<[1], [0], [0], [1], [0, 0, 1, 1], [], []>} : vector<8x128xf32>, vector<128x128xf32>, vector<8x128xf32> -> vector<8x128xf32>
    %57 = arith.addf %52, %56 : vector<8x128xf32>
    %c0_59 = arith.constant 0 : index
    %c0_60 = arith.constant 0 : index
    %58 = vector.load %arg9[%c0_59, %c0_60] : memref<1x128xf32, #tpu.memory_space<vmem>>, vector<1x128xf32>
    %59 = vector.broadcast %58 : vector<1x128xf32> to vector<8x128xf32>
    %60 = arith.addf %57, %59 : vector<8x128xf32>
    %c0_61 = arith.constant 0 : index
    %c0_62 = arith.constant 0 : index
    %61 = vector.load %arg10[%c0_61, %c0_62] : memref<8x128xf32, #tpu.memory_space<vmem>>, vector<8x128xf32>
    tpu.vector_store %arg10[%c0_61, %c0_62], %60 {strides = array<i32>} : memref<8x128xf32, #tpu.memory_space<vmem>>, vector<8x128xf32>,
    return
  }
  func.func @transform_0(%arg0: i32) -> (i32, i32) {
    %c0_i32 = arith.constant 0 : i32
    %c0_i32_0 = arith.constant 0 : i32
    return %arg0, %c0_i32 : i32, i32
  }
  func.func @transform_1(%arg0: i32) -> (i32, i32) {
    %c0_i32 = arith.constant 0 : i32
    %c0_i32_0 = arith.constant 0 : i32
    %c0_i32_1 = arith.constant 0 : i32
    return %c0_i32, %c0_i32_0 : i32, i32
  }
  func.func @transform_2(%arg0: i32) -> (i32, i32) {
    %c0_i32 = arith.constant 0 : i32
    %c0_i32_0 = arith.constant 0 : i32
    %c0_i32_1 = arith.constant 0 : i32
    return %c0_i32, %c0_i32_0 : i32, i32
  }
  func.func @transform_3(%arg0: i32) -> (i32, i32) {
    %c0_i32 = arith.constant 0 : i32
    %c0_i32_0 = arith.constant 0 : i32
    %c0_i32_1 = arith.constant 0 : i32
    return %c0_i32, %c0_i32_0 : i32, i32
  }
  func.func @transform_4(%arg0: i32) -> (i32, i32) {
    %c0_i32 = arith.constant 0 : i32
    %c0_i32_0 = arith.constant 0 : i32
    %c0_i32_1 = arith.constant 0 : i32
    return %c0_i32, %c0_i32_0 : i32, i32
  }
  func.func @transform_5(%arg0: i32) -> (i32, i32) {
    %c0_i32 = arith.constant 0 : i32
    %c0_i32_0 = arith.constant 0 : i32
    %c0_i32_1 = arith.constant 0 : i32
    return %c0_i32, %c0_i32_0 : i32, i32
  }
  func.func @transform_6(%arg0: i32) -> (i32, i32) {
    %c0_i32 = arith.constant 0 : i32
    %c0_i32_0 = arith.constant 0 : i32
    %c0_i32_1 = arith.constant 0 : i32
    return %c0_i32, %c0_i32_0 : i32, i32
  }
  func.func @transform_7(%arg0: i32) -> (i32, i32, i32) {
    %c0_i32 = arith.constant 0 : i32
    %c0_i32_0 = arith.constant 0 : i32
    %c0_i32_1 = arith.constant 0 : i32
    %c0_i32_2 = arith.constant 0 : i32
    return %c0_i32, %c0_i32_0, %c0_i32_1 : i32, i32, i32
  }
  func.func @transform_8(%arg0: i32) -> (i32, i32) {
    %c0_i32 = arith.constant 0 : i32
    %c0_i32_0 = arith.constant 0 : i32
    %c0_i32_1 = arith.constant 0 : i32
    return %c0_i32, %c0_i32_0 : i32, i32
  }
  func.func @transform_9(%arg0: i32) -> (i32, i32) {
    %c0_i32 = arith.constant 0 : i32
    %c0_i32_0 = arith.constant 0 : i32
    return %arg0, %c0_i32 : i32, i32
  }
}

</mosaic_0001>

<llo_original>
// kernel: tpu_custom_call.1
$region0: #{tpu_custom_call.1}
  #allocation0 [shape = 'u32[]', space=smem, size = 0x4, offset = 0x4, fixed_abs, tag = 'smem constant byte address 0x4 - core index']
  #allocation1 [shape = 'u32[144,128]{1,0:T(1,128)}', space=vmem, size = 0x12000, scoped, tag = 'internal scratch']
  #allocation2 [shape = 'f32[64,128]{1,0:T(8,128)}', space=vmem, size = 0x8000, scoped, tag = 'scratch operand']
  %s0 = inlined_call_operand.vmem [shape: f32[128,64], index: 0, kind: input, shape index: {}]
  %s1 = inlined_call_operand.hbm [shape: f32[64,512], index: 1, kind: input, shape index: {}]
  %s2 = inlined_call_operand.vmem [shape: f32[1,512], index: 2, kind: input, shape index: {}]
  %s3 = inlined_call_operand.hbm [shape: f32[512,256], index: 3, kind: input, shape index: {}]
  %s4 = inlined_call_operand.vmem [shape: f32[1,256], index: 4, kind: input, shape index: {}]
  %s5 = inlined_call_operand.hbm [shape: f32[256,128], index: 5, kind: input, shape index: {}]
  %s6 = inlined_call_operand.vmem [shape: f32[1,128], index: 6, kind: input, shape index: {}]
  %s7 = inlined_call_operand.hbm [shape: f32[8,128,128], index: 7, kind: input, shape index: {}]
  %s8 = inlined_call_operand.vmem [shape: f32[1,128], index: 8, kind: input, shape index: {}]
  %s9 = inlined_call_operand.hbm [shape: f32[16,128], index: 9, kind: output, shape index: {}]
  %s10 = sld [smem:[#allocation0]]
  $region85: #{tpu_custom_call.1} parent=0
    _
  %s12 = ssub.s32 1, %s10
  %s13 = scalar_select 0, %s12, %s10
  $region1: #{tpu_custom_call.1} parent=0
    #allocation3 [shape = 'u8[131072]{0}', space=vmem, size = 0x20000, scoped, tag = 'input window, operand 1, single buffered']
    #allocation4 [shape = 's32[2]{0}', space=sflag, size = 0x8, scoped, tag = 'scoped memory for tpu_custom_call.1']
    #allocation5 [shape = 's32[2]{0}', space=sflag, size = 0x8, scoped, tag = 'scoped memory for tpu_custom_call.1']
    #allocation6 [shape = 'u8[524288]{0}', space=vmem, size = 0x80000, scoped, tag = 'input window, operand 3, single buffered']
    #allocation7 [shape = 's32[1]{0}', space=sflag, size = 0x4, scoped, tag = 'scoped memory for tpu_custom_call.1']
    #allocation8 [shape = 'u8[131072]{0}', space=vmem, size = 0x20000, scoped, tag = 'input window, operand 5, single buffered']
    #allocation9 [shape = 'u8[524288]{0}', space=vmem, size = 0x80000, scoped, tag = 'input window, operand 7, single buffered']
    #allocation10 [shape = 's32[1]{0}', space=sflag, size = 0x4, scoped, tag = 'scoped memory for tpu_custom_call.1']
    #allocation11 [shape = 'u8[8192]{0}', space=vmem, size = 0x2000, scoped, tag = 'output window, operand 0']
    %14 = vsyncpa [#allocation4], 0
    %15 = vsyncpa [#allocation7], 0
    %16 = vsyncpa [#allocation10], 0
    %17 = vsyncpa [#allocation5], 0
    %s18 = scalar_lea.sflag [#allocation5], 1
    %19 = vsyncpa %s18, 0
    loop: start=0, step=1, limit=4
    $region2: #{tpu_custom_call.1} parent=1 // loop_pre_header
      _
    $region3: #{tpu_custom_call.1} parent=1 // loop_header
      %s21 = sphi 0, %s25
      %p22 = scmp.ge.s32.totalorder %s21, 4
      %s31 = sphi 0, %s33
      %s34 = sphi 0, %s31
      %s35 = sphi 0, %s34
      %s51 = sphi 0, %s35
      %s55 = sphi 0, %s55
      %s57 = sphi 0, %s55
      %s58 = sphi 0, %s57
      %s72 = sphi 0, %s58
      %s76 = sphi 0, %s76
      %s78 = sphi 0, %s76
      %s79 = sphi 0, %s78
      %s93 = sphi 0, %s79
      %s97 = sphi 0, %s97
      %s99 = sphi 0, %s97
      %s100 = sphi 0, %s99
      %s114 = sphi 0, %s100
      %s118 = sphi 0, %s118
      %s120 = sphi 0, %s118
      %s121 = sphi 0, %s120
      %s135 = sphi 0, %s121
      %s139 = sphi 0, %s139
      %s141 = sphi 0, %s139
      %s142 = sphi 0, %s141
      %s156 = sphi 0, %s142
      %s160 = sphi 0, %s160
      %s162 = sphi 0, %s160
      %s163 = sphi 0, %s162
      %s177 = sphi 0, %s163
      %s181 = sphi 0, %s181
      %s183 = sphi 0, %s181
      %s184 = sphi 0, %s183
      %s198 = sphi 0, %s184
      %s202 = sphi 0, %s202
      %s204 = sphi 0, %s202
      %s205 = sphi 0, %s204
      %s219 = sphi 0, %s205
      %s225 = sphi 0, %s227
      %s228 = sphi 0, %s225
      %s229 = sphi 0, %s228
      %s245 = sphi 0, %s229
    $region4: #{tpu_custom_call.1} parent=1 // loop_header_branch
      %24 = sbr.rel (%p22) target = $region8
    $region5: #{tpu_custom_call.1} parent=1 // loop_body
      %s26 = ssub.s32 %s21, 1
      %s27 = ssub.s32 %s21, 2
      %s28 = sadd.s32 %s21, 1
      %s29 = ssub.s32 %s21, %s28
      %p30 = scmp.eq.s32.totalorder %s29, 0
      %s32 = sadd.s32 %s31, 1
      %s33 = scalar_select %p30, %s31, %s32
      %p36 = pneg %p30
      %p37 = scmp.eq.s32.totalorder %s21, 1
      %p38 = por %p36, %p37
      %p39 = scmp.ne.s32.totalorder %s31, %s34
      %p40 = scmp.eq.s32.totalorder %s21, 0
      %p41 = por %p39, %p40
      %p42 = scmp.ne.s32.totalorder %s31, %s34
      %p43 = scmp.eq.s32.totalorder %s26, 1
      %p44 = por %p42, %p43
      %p45 = scmp.ne.s32.totalorder %s34, %s35
      %p46 = scmp.eq.s32.totalorder %s26, 0
      %p47 = por %p45, %p46
      %p48 = scmp.ne.s32.totalorder %s34, %s35
      %p49 = scmp.eq.s32.totalorder %s27, 1
      %p50 = por %p48, %p49
      %p52 = scmp.ne.s32.totalorder %s35, %s51
      %p53 = scmp.eq.s32.totalorder %s27, 0
      %p54 = por %p52, %p53
      %s56 = sadd.s32 %s55, 1
      %p59 = scmp.eq.s32.totalorder %s21, 1
      %p60 = scmp.ne.s32.totalorder %s55, %s57
      %p61 = scmp.eq.s32.totalorder %s21, 0
      %p62 = por %p60, %p61
      %p63 = scmp.ne.s32.totalorder %s55, %s57
      %p64 = scmp.eq.s32.totalorder %s26, 1
      %p65 = por %p63, %p64
      %p66 = scmp.ne.s32.totalorder %s57, %s58
      %p67 = scmp.eq.s32.totalorder %s26, 0
      %p68 = por %p66, %p67
      %p69 = scmp.ne.s32.totalorder %s57, %s58
      %p70 = scmp.eq.s32.totalorder %s27, 1
      %p71 = por %p69, %p70
      %p73 = scmp.ne.s32.totalorder %s58, %s72
      %p74 = scmp.eq.s32.totalorder %s27, 0
      %p75 = por %p73, %p74
      %s77 = sadd.s32 %s76, 1
      %p80 = scmp.eq.s32.totalorder %s21, 1
      %p81 = scmp.ne.s32.totalorder %s76, %s78
      %p82 = scmp.eq.s32.totalorder %s21, 0
      %p83 = por %p81, %p82
      %p84 = scmp.ne.s32.totalorder %s76, %s78
      %p85 = scmp.eq.s32.totalorder %s26, 1
      %p86 = por %p84, %p85
      %p87 = scmp.ne.s32.totalorder %s78, %s79
      %p88 = scmp.eq.s32.totalorder %s26, 0
      %p89 = por %p87, %p88
      %p90 = scmp.ne.s32.totalorder %s78, %s79
      %p91 = scmp.eq.s32.totalorder %s27, 1
      %p92 = por %p90, %p91
      %p94 = scmp.ne.s32.totalorder %s79, %s93
      %p95 = scmp.eq.s32.totalorder %s27, 0
      %p96 = por %p94, %p95
      %s98 = sadd.s32 %s97, 1
      %p101 = scmp.eq.s32.totalorder %s21, 1
      %p102 = scmp.ne.s32.totalorder %s97, %s99
      %p103 = scmp.eq.s32.totalorder %s21, 0
      %p104 = por %p102, %p103
      %p105 = scmp.ne.s32.totalorder %s97, %s99
      %p106 = scmp.eq.s32.totalorder %s26, 1
      %p107 = por %p105, %p106
      %p108 = scmp.ne.s32.totalorder %s99, %s100
      %p109 = scmp.eq.s32.totalorder %s26, 0
      %p110 = por %p108, %p109
      %p111 = scmp.ne.s32.totalorder %s99, %s100
      %p112 = scmp.eq.s32.totalorder %s27, 1
      %p113 = por %p111, %p112
      %p115 = scmp.ne.s32.totalorder %s100, %s114
      %p116 = scmp.eq.s32.totalorder %s27, 0
      %p117 = por %p115, %p116
      %s119 = sadd.s32 %s118, 1
      %p122 = scmp.eq.s32.totalorder %s21, 1
      %p123 = scmp.ne.s32.totalorder %s118, %s120
      %p124 = scmp.eq.s32.totalorder %s21, 0
      %p125 = por %p123, %p124
      %p126 = scmp.ne.s32.totalorder %s118, %s120
      %p127 = scmp.eq.s32.totalorder %s26, 1
      %p128 = por %p126, %p127
      %p129 = scmp.ne.s32.totalorder %s120, %s121
      %p130 = scmp.eq.s32.totalorder %s26, 0
      %p131 = por %p129, %p130
      %p132 = scmp.ne.s32.totalorder %s120, %s121
      %p133 = scmp.eq.s32.totalorder %s27, 1
      %p134 = por %p132, %p133
      %p136 = scmp.ne.s32.totalorder %s121, %s135
      %p137 = scmp.eq.s32.totalorder %s27, 0
      %p138 = por %p136, %p137
      %s140 = sadd.s32 %s139, 1
      %p143 = scmp.eq.s32.totalorder %s21, 1
      %p144 = scmp.ne.s32.totalorder %s139, %s141
      %p145 = scmp.eq.s32.totalorder %s21, 0
      %p146 = por %p144, %p145
      %p147 = scmp.ne.s32.totalorder %s139, %s141
      %p148 = scmp.eq.s32.totalorder %s26, 1
      %p149 = por %p147, %p148
      %p150 = scmp.ne.s32.totalorder %s141, %s142
      %p151 = scmp.eq.s32.totalorder %s26, 0
      %p152 = por %p150, %p151
      %p153 = scmp.ne.s32.totalorder %s141, %s142
      %p154 = scmp.eq.s32.totalorder %s27, 1
      %p155 = por %p153, %p154
      %p157 = scmp.ne.s32.totalorder %s142, %s156
      %p158 = scmp.eq.s32.totalorder %s27, 0
      %p159 = por %p157, %p158
      %s161 = sadd.s32 %s160, 1
      %p164 = scmp.eq.s32.totalorder %s21, 1
      %p165 = scmp.ne.s32.totalorder %s160, %s162
      %p166 = scmp.eq.s32.totalorder %s21, 0
      %p167 = por %p165, %p166
      %p168 = scmp.ne.s32.totalorder %s160, %s162
      %p169 = scmp.eq.s32.totalorder %s26, 1
      %p170 = por %p168, %p169
      %p171 = scmp.ne.s32.totalorder %s162, %s163
      %p172 = scmp.eq.s32.totalorder %s26, 0
      %p173 = por %p171, %p172
      %p174 = scmp.ne.s32.totalorder %s162, %s163
      %p175 = scmp.eq.s32.totalorder %s27, 1
      %p176 = por %p174, %p175
      %p178 = scmp.ne.s32.totalorder %s163, %s177
      %p179 = scmp.eq.s32.totalorder %s27, 0
      %p180 = por %p178, %p179
      %s182 = sadd.s32 %s181, 1
      %p185 = scmp.eq.s32.totalorder %s21, 1
      %p186 = scmp.ne.s32.totalorder %s181, %s183
      %p187 = scmp.eq.s32.totalorder %s21, 0
      %p188 = por %p186, %p187
      %p189 = scmp.ne.s32.totalorder %s181, %s183
      %p190 = scmp.eq.s32.totalorder %s26, 1
      %p191 = por %p189, %p190
      %p192 = scmp.ne.s32.totalorder %s183, %s184
      %p193 = scmp.eq.s32.totalorder %s26, 0
      %p194 = por %p192, %p193
      %p195 = scmp.ne.s32.totalorder %s183, %s184
      %p196 = scmp.eq.s32.totalorder %s27, 1
      %p197 = por %p195, %p196
      %p199 = scmp.ne.s32.totalorder %s184, %s198
      %p200 = scmp.eq.s32.totalorder %s27, 0
      %p201 = por %p199, %p200
      %s203 = sadd.s32 %s202, 1
      %p206 = scmp.eq.s32.totalorder %s21, 1
      %p207 = scmp.ne.s32.totalorder %s202, %s204
      %p208 = scmp.eq.s32.totalorder %s21, 0
      %p209 = por %p207, %p208
      %p210 = scmp.ne.s32.totalorder %s202, %s204
      %p211 = scmp.eq.s32.totalorder %s26, 1
      %p212 = por %p210, %p211
      %p213 = scmp.ne.s32.totalorder %s204, %s205
      %p214 = scmp.eq.s32.totalorder %s26, 0
      %p215 = por %p213, %p214
      %p216 = scmp.ne.s32.totalorder %s204, %s205
      %p217 = scmp.eq.s32.totalorder %s27, 1
      %p218 = por %p216, %p217
      %p220 = scmp.ne.s32.totalorder %s205, %s219
      %p221 = scmp.eq.s32.totalorder %s27, 0
      %p222 = por %p220, %p221
      %s223 = ssub.s32 %s21, %s28
      %p224 = scmp.eq.s32.totalorder %s223, 0
      %s226 = sadd.s32 %s225, 1
      %s227 = scalar_select %p224, %s225, %s226
      %p230 = pneg %p224
      %p231 = scmp.eq.s32.totalorder %s21, 1
      %p232 = por %p230, %p231
      %p233 = scmp.ne.s32.totalorder %s225, %s228
      %p234 = scmp.eq.s32.totalorder %s21, 0
      %p235 = por %p233, %p234
      %p236 = scmp.ne.s32.totalorder %s225, %s228
      %p237 = scmp.eq.s32.totalorder %s26, 1
      %p238 = por %p236, %p237
      %p239 = scmp.ne.s32.totalorder %s228, %s229
      %p240 = scmp.eq.s32.totalorder %s26, 0
      %p241 = por %p239, %p240
      %p242 = scmp.ne.s32.totalorder %s228, %s229
      %p243 = scmp.eq.s32.totalorder %s27, 1
      %p244 = por %p242, %p243
      %p246 = scmp.ne.s32.totalorder %s229, %s245
      %p247 = scmp.eq.s32.totalorder %s27, 0
      %p248 = por %p246, %p247
      %p249 = scmp.le.s32.totalorder 1, %s21
      %p250 = scmp.lt.s32.totalorder %s21, 3
      %p251 = pnand %p249, %p250
      %p252 = pneg %p251
      // Predicated region
      $region9: #{tpu_custom_call.1} parent=5 // pred_check
        _
      $region10: #{tpu_custom_call.1} parent=5 // pred_check_branch
        %254 = sbr.rel (%p251) target = $region12
      $region11: #{tpu_custom_call.1} parent=5 // pred_region
        %s255 = ssub.s32 %s21, 1
        // Predicated region
        $region13: #{tpu_custom_call.1} parent=11 // pred_check
          %p256 = pneg %p68
        $region14: #{tpu_custom_call.1} parent=11 // pred_check_branch
          %258 = sbr.rel (%p256) target = $region16
        $region15: #{tpu_custom_call.1} parent=11 // pred_region
          %s260 = ssub.s32 4096, 4096
          %261 = vsyncadd [#allocation4], %s260
          %s262 = sshll.u32 [#allocation3], 4
          %s263 = int_to_ptr.vmem [resolvable:$true] %s262
          %268 = dma.hbm_to_vmem [thread:$0]  %s1, 4096, %s263, [#allocation4], 512, 512, 32
        $region16: #{tpu_custom_call.1} parent=11 // pred_fallthru
          _
        // Predicated region
        $region17: #{tpu_custom_call.1} parent=11 // pred_check
          %p269 = pneg %p89
        $region18: #{tpu_custom_call.1} parent=11 // pred_check_branch
          %271 = sbr.rel (%p269) target = $region20
        $region19: #{tpu_custom_call.1} parent=11 // pred_region
          _
        $region20: #{tpu_custom_call.1} parent=11 // pred_fallthru
          _
        // Predicated region
        $region21: #{tpu_custom_call.1} parent=11 // pred_check
          %p272 = pneg %p110
        $region22: #{tpu_custom_call.1} parent=11 // pred_check_branch
          %274 = sbr.rel (%p272) target = $region24
        $region23: #{tpu_custom_call.1} parent=11 // pred_region
          %s276 = ssub.s32 16384, 16384
          %277 = vsyncadd [#allocation7], %s276
          %s278 = sshll.u32 [#allocation6], 4
          %s279 = int_to_ptr.vmem [resolvable:$true] %s278
          %284 = dma.hbm_to_vmem [thread:$0]  %s3, 16384, %s279, [#allocation7], 256, 256, 16
        $region24: #{tpu_custom_call.1} parent=11 // pred_fallthru
          _
        // Predicated region
        $region25: #{tpu_custom_call.1} parent=11 // pred_check
          %p285 = pneg %p131
        $region26: #{tpu_custom_call.1} parent=11 // pred_check_branch
          %287 = sbr.rel (%p285) target = $region28
        $region27: #{tpu_custom_call.1} parent=11 // pred_region
          _
        $region28: #{tpu_custom_call.1} parent=11 // pred_fallthru
          _
        // Predicated region
        $region29: #{tpu_custom_call.1} parent=11 // pred_check
          %p288 = pneg %p152
        $region30: #{tpu_custom_call.1} parent=11 // pred_check_branch
          %290 = sbr.rel (%p288) target = $region32
        $region31: #{tpu_custom_call.1} parent=11 // pred_region
          %s292 = ssub.s32 4096, 4096
          %293 = vsyncadd [#allocation7], %s292
          %s294 = sshll.u32 [#allocation8], 4
          %s295 = int_to_ptr.vmem [resolvable:$true] %s294
          %300 = dma.hbm_to_vmem [thread:$0]  %s5, 4096, %s295, [#allocation7], 128, 128, 8
        $region32: #{tpu_custom_call.1} parent=11 // pred_fallthru
          _
        // Predicated region
        $region33: #{tpu_custom_call.1} parent=11 // pred_check
          %p301 = pneg %p173
        $region34: #{tpu_custom_call.1} parent=11 // pred_check_branch
          %303 = sbr.rel (%p301) target = $region36
        $region35: #{tpu_custom_call.1} parent=11 // pred_region
          _
        $region36: #{tpu_custom_call.1} parent=11 // pred_fallthru
          _
        // Predicated region
        $region37: #{tpu_custom_call.1} parent=11 // pred_check
          %p304 = pneg %p194
        $region38: #{tpu_custom_call.1} parent=11 // pred_check_branch
          %306 = sbr.rel (%p304) target = $region40
        $region39: #{tpu_custom_call.1} parent=11 // pred_region
          %s308 = ssub.s32 16384, 16384
          %309 = vsyncadd [#allocation10], %s308
          %s310 = sshll.u32 [#allocation9], 4
          %s311 = int_to_ptr.vmem [resolvable:$true] %s310
          %316 = dma.hbm_to_vmem [thread:$0]  %s7, 16384, %s311, [#allocation10], 128, 128, 8
        $region40: #{tpu_custom_call.1} parent=11 // pred_fallthru
          _
        // Predicated region
        $region41: #{tpu_custom_call.1} parent=11 // pred_check
          %p317 = pneg %p215
        $region42: #{tpu_custom_call.1} parent=11 // pred_check_branch
          %319 = sbr.rel (%p317) target = $region44
        $region43: #{tpu_custom_call.1} parent=11 // pred_region
          _
        $region44: #{tpu_custom_call.1} parent=11 // pred_fallthru
          _
      $region12: #{tpu_custom_call.1} parent=5 // pred_fallthru
        _
      %p320 = scmp.lt.s32.totalorder %s21, 2
      // Predicated region
      $region45: #{tpu_custom_call.1} parent=5 // pred_check
        %p321 = pneg %p320
      $region46: #{tpu_custom_call.1} parent=5 // pred_check_branch
        %323 = sbr.rel (%p321) target = $region48
      $region47: #{tpu_custom_call.1} parent=5 // pred_region
        // Predicated region
        $region49: #{tpu_custom_call.1} parent=47 // pred_check
          %p324 = pneg %p41
        $region50: #{tpu_custom_call.1} parent=47 // pred_check_branch
          %326 = sbr.rel (%p324) target = $region52
        $region51: #{tpu_custom_call.1} parent=47 // pred_region
          %s327 = smul.u32 8, %s21
          %p328 = scmp.lt.s32.totalorder %s327, 15
          %s329 = scalar_select %p328, %s327, 15
          %s330 = smul.addr %s329, 8
          %s331 = scalar_lea.vmem %s0, %s330
          %s332 = smul.u32 8, %s21
        $region52: #{tpu_custom_call.1} parent=47 // pred_fallthru
          _
      $region48: #{tpu_custom_call.1} parent=5 // pred_fallthru
        _
      %p333 = scmp.le.s32.totalorder 1, %s21
      %p334 = scmp.lt.s32.totalorder %s21, 3
      %p335 = pnand %p333, %p334
      %p336 = pneg %p335
      // Predicated region
      $region53: #{tpu_custom_call.1} parent=5 // pred_check
        _
      $region54: #{tpu_custom_call.1} parent=5 // pred_check_branch
        %338 = sbr.rel (%p335) target = $region56
      $region55: #{tpu_custom_call.1} parent=5 // pred_region
        %s339 = ssub.s32 %s21, 1
        // Predicated region
        $region57: #{tpu_custom_call.1} parent=55 // pred_check
          %p340 = pneg %p68
        $region58: #{tpu_custom_call.1} parent=55 // pred_check_branch
          %342 = sbr.rel (%p340) target = $region60
        $region59: #{tpu_custom_call.1} parent=55 // pred_region
          %343 = dma.done [#allocation4], 4096
        $region60: #{tpu_custom_call.1} parent=55 // pred_fallthru
          _
        // Predicated region
        $region61: #{tpu_custom_call.1} parent=55 // pred_check
          %p344 = pneg %p110
        $region62: #{tpu_custom_call.1} parent=55 // pred_check_branch
          %346 = sbr.rel (%p344) target = $region64
        $region63: #{tpu_custom_call.1} parent=55 // pred_region
          %347 = dma.done [#allocation7], 16384
        $region64: #{tpu_custom_call.1} parent=55 // pred_fallthru
          _
        // Predicated region
        $region65: #{tpu_custom_call.1} parent=55 // pred_check
          %p348 = pneg %p152
        $region66: #{tpu_custom_call.1} parent=55 // pred_check_branch
          %350 = sbr.rel (%p348) target = $region68
        $region67: #{tpu_custom_call.1} parent=55 // pred_region
          %351 = dma.done [#allocation7], 4096
        $region68: #{tpu_custom_call.1} parent=55 // pred_fallthru
          _
        // Predicated region
        $region69: #{tpu_custom_call.1} parent=55 // pred_check
          %p352 = pneg %p194
        $region70: #{tpu_custom_call.1} parent=55 // pred_check_branch
          %354 = sbr.rel (%p352) target = $region72
        $region71: #{tpu_custom_call.1} parent=55 // pred_region
          %355 = dma.done [#allocation10], 16384
        $region72: #{tpu_custom_call.1} parent=55 // pred_fallthru
          _
        %s356 = smul.u32 8, %s26
        %p357 = scmp.lt.s32.totalorder %s356, 15
        %s358 = scalar_select %p357, %s356, 15
        %s359 = smul.addr %s358, 8
        %s360 = scalar_lea.vmem %s0, %s359
        %p361 = pneg %p47
        %p362 = pneg %p44
        %p363 = pneg %p68
        %p364 = pneg %p65
        %p365 = pneg %p89
        %p366 = pneg %p86
        %p367 = pneg %p110
        %p368 = pneg %p107
        %p369 = pneg %p131
        %p370 = pneg %p128
        %p371 = pneg %p152
        %p372 = pneg %p149
        %p373 = pneg %p173
        %p374 = pneg %p170
        %p375 = pneg %p194
        %p376 = pneg %p191
        %p377 = pneg %p215
        %p378 = pneg %p212
        %p379 = pneg %p241
        %p380 = pneg %p238
        %s381 = sand.u32 %s228, 1
        %s382 = scalar_lea.sflag [#allocation5], %s381
        %s383 = sand.u32 %s228, 1
        %s384 = smul.addr %s383, 8
        %s385 = scalar_lea.vmem [#allocation11], %s384
        %s386 = smul.u32 8, %s26
        %p387 = scmp.lt.s32.totalorder %s386, 15
        %s388 = scalar_select %p387, %s386, 15
        %s389 = smul.addr %s388, 8
        %s390 = scalar_lea.vmem %s0, %s389
        %s391 = smul.u32 8, %s26
        %v392 = vld [vmem:[%s390] sm:$0xff]
        %v393 = vld [vmem:[%s390 + $0x8] sm:$0xff]
        %v394 = vld [vmem:[%s390 + $0x10] sm:$0xff]
        %v395 = vld [vmem:[%s390 + $0x18] sm:$0xff]
        %v396 = vld [vmem:[%s390 + $0x20] sm:$0xff]
        %v397 = vld [vmem:[%s390 + $0x28] sm:$0xff]
        %v398 = vld [vmem:[%s390 + $0x30] sm:$0xff]
        %v399 = vld [vmem:[%s390 + $0x38] sm:$0xff]
        %v400 = vld [vmem:[#allocation3] sm:$0xff]
        %v401 = vld [vmem:[#allocation3 + $0x8] sm:$0xff]
        %v402 = vld [vmem:[#allocation3 + $0x10] sm:$0xff]
        %v403 = vld [vmem:[#allocation3 + $0x18] sm:$0xff]
        %v404 = vld [vmem:[#allocation3 + $0x20] sm:$0xff]
        %v405 = vld [vmem:[#allocation3 + $0x28] sm:$0xff]
        %v406 = vld [vmem:[#allocation3 + $0x30] sm:$0xff]
        %v407 = vld [vmem:[#allocation3 + $0x38] sm:$0xff]
        %v408 = vld [vmem:[#allocation3 + $0x40] sm:$0xff]
        %v409 = vld [vmem:[#allocation3 + $0x48] sm:$0xff]
        %v410 = vld [vmem:[#allocation3 + $0x50] sm:$0xff]
        %v411 = vld [vmem:[#allocation3 + $0x58] sm:$0xff]
        %v412 = vld [vmem:[#allocation3 + $0x60] sm:$0xff]
        %v413 = vld [vmem:[#allocation3 + $0x68] sm:$0xff]
        %v414 = vld [vmem:[#allocation3 + $0x70] sm:$0xff]
        %v415 = vld [vmem:[#allocation3 + $0x78] sm:$0xff]
        %v416 = vld [vmem:[#allocation3 + $0x80] sm:$0xff]
        %v417 = vld [vmem:[#allocation3 + $0x88] sm:$0xff]
        %v418 = vld [vmem:[#allocation3 + $0x90] sm:$0xff]
        %v419 = vld [vmem:[#allocation3 + $0x98] sm:$0xff]
        %v420 = vld [vmem:[#allocation3 + $0xa0] sm:$0xff]
        %v421 = vld [vmem:[#allocation3 + $0xa8] sm:$0xff]
        %v422 = vld [vmem:[#allocation3 + $0xb0] sm:$0xff]
        %v423 = vld [vmem:[#allocation3 + $0xb8] sm:$0xff]
        %v424 = vld [vmem:[#allocation3 + $0xc0] sm:$0xff]
        %v425 = vld [vmem:[#allocation3 + $0xc8] sm:$0xff]
        %v426 = vld [vmem:[#allocation3 + $0xd0] sm:$0xff]
        %v427 = vld [vmem:[#allocation3 + $0xd8] sm:$0xff]
        %v428 = vld [vmem:[#allocation3 + $0xe0] sm:$0xff]
        %v429 = vld [vmem:[#allocation3 + $0xe8] sm:$0xff]
        %v430 = vld [vmem:[#allocation3 + $0xf0] sm:$0xff]
        %v431 = vld [vmem:[#allocation3 + $0xf8] sm:$0xff]
        %v432 = vld [vmem:[%s2] sm:$0xf]
        %v434 = vlaneseq
        %v435 = vshrl.u32 %v434, 7
        %v436 = vsub.s32 0, %v435
        %v437 = vrot.slane %v432, %v436
        %v438 = vlaneseq
        %v439 = vshrl.u32 %v438, 7
        %v440 = vsub.s32 1, %v439
        %v441 = vrot.slane %v432, %v440
        %v442 = vlaneseq
        %v443 = vshrl.u32 %v442, 7
        %v444 = vsub.s32 2, %v443
        %v445 = vrot.slane %v432, %v444
        %v446 = vlaneseq
        %v447 = vshrl.u32 %v446, 7
        %v448 = vsub.s32 3, %v447
        %v449 = vrot.slane %v432, %v448
        %vm454 = vcmask 523264
        %v456 = vsel %vm454, %v392, 0
        %v459 = vsel %vm454, %v393, 0
        %v462 = vsel %vm454, %v394, 0
        %v465 = vsel %vm454, %v395, 0
        %v468 = vsel %vm454, %v396, 0
        %v471 = vsel %vm454, %v397, 0
        %v474 = vsel %vm454, %v398, 0
        %v477 = vsel %vm454, %v399, 0
        %479 = vmatprep.subr.mxu0 %v401
        %480 = vmatpush1.msra.mxu0 %v400
        %481 = vmatprep.subr.mxu0 %v405
        %482 = vmatpush1.msra.mxu0 %v404
        %483 = vmatprep.subr.mxu0 %v409
        %484 = vmatpush1.msra.mxu0 %v408
        %485 = vmatprep.subr.mxu0 %v413
        %486 = vmatpush1.msra.mxu0 %v412
        %487 = vmatprep.subr.mxu0 %v417
        %488 = vmatpush1.msra.mxu0 %v416
        %489 = vmatprep.subr.mxu0 %v421
        %490 = vmatpush1.msra.mxu0 %v420
        %491 = vmatprep.subr.mxu0 %v425
        %492 = vmatpush1.msra.mxu0 %v424
        %493 = vmatprep.subr.mxu0 %v429
        %494 = vmatpush1.msra.mxu0 %v428
        %495 = vmatprep.subr.mxu0 0.0
        %496 = vmatpush1.msra.mxu0 0.0
        %497 = vmatprep.subr.mxu0 0.0
        %498 = vmatpush1.msra.mxu0 0.0
        %499 = vmatprep.subr.mxu0 0.0
        %500 = vmatpush1.msra.mxu0 0.0
        %501 = vmatprep.subr.mxu0 0.0
        %502 = vmatpush1.msra.mxu0 0.0
        %503 = vmatprep.subr.mxu0 0.0
        %504 = vmatpush1.msra.mxu0 0.0
        %505 = vmatprep.subr.mxu0 0.0
        %506 = vmatpush1.msra.mxu0 0.0
        %507 = vmatprep.subr.mxu0 0.0
        %508 = vmatpush1.msra.mxu0 0.0
        %509 = vmatprep.subr.mxu0 0.0
        %510 = vmatpush1.msra.mxu0 0.0
        %511 = vmatprep.subr.mxu0 0.0
        %512 = vmatpush1.msra.mxu0 0.0
        %513 = vmatprep.subr.mxu0 0.0
        %514 = vmatpush1.msra.mxu0 0.0
        %515 = vmatprep.subr.mxu0 0.0
        %516 = vmatpush1.msra.mxu0 0.0
        %517 = vmatprep.subr.mxu0 0.0
        %518 = vmatpush1.msra.mxu0 0.0
        %519 = vmatprep.subr.mxu0 0.0
        %520 = vmatpush1.msra.mxu0 0.0
        %521 = vmatprep.subr.mxu0 0.0
        %522 = vmatpush1.msra.mxu0 0.0
        %523 = vmatprep.subr.mxu0 0.0
        %524 = vmatpush1.msra.mxu0 0.0
        %525 = vmatprep.subr.mxu0 0.0
        %526 = vmatpush1.msra.mxu0 0.0
        %527 = vmatprep.subr.mxu0 0.0
        %528 = vmatpush1.msra.mxu0 0.0
        %529 = vmatprep.subr.mxu0 0.0
        %530 = vmatpush1.msra.mxu0 0.0
        %531 = vmatprep.subr.mxu0 0.0
        %532 = vmatpush1.msra.mxu0 0.0
        %533 = vmatprep.subr.mxu0 0.0
        %534 = vmatpush1.msra.mxu0 0.0
        %535 = vmatprep.subr.mxu0 0.0
        %536 = vmatpush1.msra.mxu0 0.0
        %537 = vmatprep.subr.mxu0 0.0
        %538 = vmatpush1.msra.mxu0 0.0
        %539 = vmatprep.subr.mxu0 0.0
        %540 = vmatpush1.msra.mxu0 0.0
        %541 = vmatprep.subr.mxu0 0.0
        %542 = vmatpush1.msra.mxu0 0.0
        %543 = vmatprep.mubr.f32.mxu0 0.0
        %544 = vmatmul.mubr.f32.gmra.mrb[0].mxu0 %v456
        %v545 = vpop.f32.mrb[0].mxu0
        %v546 = vadd.f32 %v437, %v545
        %v547 = vpop.f32.mrb[0].mxu0
        %v548 = vadd.f32 %v441, %v547
        %549 = vmatprep.mubr.f32.mxu0 0.0
        %550 = vmatmul.mubr.f32.gmra.mrb[0].mxu0 %v459
        %v551 = vpop.f32.mrb[0].mxu0
        %v552 = vadd.f32 %v437, %v551
        %v553 = vpop.f32.mrb[0].mxu0
        %v554 = vadd.f32 %v441, %v553
        %555 = vmatprep.mubr.f32.mxu0 0.0
        %556 = vmatmul.mubr.f32.gmra.mrb[0].mxu0 %v462
        %v557 = vpop.f32.mrb[0].mxu0
        %v558 = vadd.f32 %v437, %v557
        %v559 = vpop.f32.mrb[0].mxu0
        %v560 = vadd.f32 %v441, %v559
        %561 = vmatprep.mubr.f32.mxu0 0.0
        %562 = vmatmul.mubr.f32.gmra.mrb[0].mxu0 %v465
        %v563 = vpop.f32.mrb[0].mxu0
        %v564 = vadd.f32 %v437, %v563
        %v565 = vpop.f32.mrb[0].mxu0
        %v566 = vadd.f32 %v441, %v565
        %567 = vmatprep.mubr.f32.mxu0 0.0
        %568 = vmatmul.mubr.f32.gmra.mrb[0].mxu0 %v468
        %v569 = vpop.f32.mrb[0].mxu0
        %v570 = vadd.f32 %v437, %v569
        %v571 = vpop.f32.mrb[0].mxu0
        %v572 = vadd.f32 %v441, %v571
        %573 = vmatprep.mubr.f32.mxu0 0.0
        %574 = vmatmul.mubr.f32.gmra.mrb[0].mxu0 %v471
        %v575 = vpop.f32.mrb[0].mxu0
        %v576 = vadd.f32 %v437, %v575
        %v577 = vpop.f32.mrb[0].mxu0
        %v578 = vadd.f32 %v441, %v577
        %579 = vmatprep.mubr.f32.mxu0 0.0
        %580 = vmatmul.mubr.f32.gmra.mrb[0].mxu0 %v474
        %v581 = vpop.f32.mrb[0].mxu0
        %v582 = vadd.f32 %v437, %v581
        %v583 = vpop.f32.mrb[0].mxu0
        %v584 = vadd.f32 %v441, %v583
        %585 = vmatprep.mubr.f32.mxu0 0.0
        %586 = vmatmul.mubr.f32.gmra.mrb[0].mxu0 %v477
        %v587 = vpop.f32.mrb[0].mxu0
        %v588 = vadd.f32 %v437, %v587
        %v589 = vpop.f32.mrb[0].mxu0
        %v590 = vadd.f32 %v441, %v589
        %591 = vdwg.mxu0
        %592 = vmatprep.subr.mxu0 %v403
        %593 = vmatpush1.msra.mxu0 %v402
        %594 = vmatprep.subr.mxu0 %v407
        %595 = vmatpush1.msra.mxu0 %v406
        %596 = vmatprep.subr.mxu0 %v411
        %597 = vmatpush1.msra.mxu0 %v410
        %598 = vmatprep.subr.mxu0 %v415
        %599 = vmatpush1.msra.mxu0 %v414
        %600 = vmatprep.subr.mxu0 %v419
        %601 = vmatpush1.msra.mxu0 %v418
        %602 = vmatprep.subr.mxu0 %v423
        %603 = vmatpush1.msra.mxu0 %v422
        %604 = vmatprep.subr.mxu0 %v427
        %605 = vmatpush1.msra.mxu0 %v426
        %606 = vmatprep.subr.mxu0 %v431
        %607 = vmatpush1.msra.mxu0 %v430
        %608 = vmatprep.subr.mxu0 0.0
        %609 = vmatpush1.msra.mxu0 0.0
        %610 = vmatprep.subr.mxu0 0.0
        %611 = vmatpush1.msra.mxu0 0.0
        %612 = vmatprep.subr.mxu0 0.0
        %613 = vmatpush1.msra.mxu0 0.0
        %614 = vmatprep.subr.mxu0 0.0
        %615 = vmatpush1.msra.mxu0 0.0
        %616 = vmatprep.subr.mxu0 0.0
        %617 = vmatpush1.msra.mxu0 0.0
        %618 = vmatprep.subr.mxu0 0.0
        %619 = vmatpush1.msra.mxu0 0.0
        %620 = vmatprep.subr.mxu0 0.0
        %621 = vmatpush1.msra.mxu0 0.0
        %622 = vmatprep.subr.mxu0 0.0
        %623 = vmatpush1.msra.mxu0 0.0
        %624 = vmatprep.subr.mxu0 0.0
        %625 = vmatpush1.msra.mxu0 0.0
        %626 = vmatprep.subr.mxu0 0.0
        %627 = vmatpush1.msra.mxu0 0.0
        %628 = vmatprep.subr.mxu0 0.0
        %629 = vmatpush1.msra.mxu0 0.0
        %630 = vmatprep.subr.mxu0 0.0
        %631 = vmatpush1.msra.mxu0 0.0
        %632 = vmatprep.subr.mxu0 0.0
        %633 = vmatpush1.msra.mxu0 0.0
        %634 = vmatprep.subr.mxu0 0.0
        %635 = vmatpush1.msra.mxu0 0.0
        %636 = vmatprep.subr.mxu0 0.0
        %637 = vmatpush1.msra.mxu0 0.0
        %638 = vmatprep.subr.mxu0 0.0
        %639 = vmatpush1.msra.mxu0 0.0
        %640 = vmatprep.subr.mxu0 0.0
        %641 = vmatpush1.msra.mxu0 0.0
        %642 = vmatprep.subr.mxu0 0.0
        %643 = vmatpush1.msra.mxu0 0.0
        %644 = vmatprep.subr.mxu0 0.0
        %645 = vmatpush1.msra.mxu0 0.0
        %646 = vmatprep.subr.mxu0 0.0
        %647 = vmatpush1.msra.mxu0 0.0
        %648 = vmatprep.subr.mxu0 0.0
        %649 = vmatpush1.msra.mxu0 0.0
        %650 = vmatprep.subr.mxu0 0.0
        %651 = vmatpush1.msra.mxu0 0.0
        %652 = vmatprep.subr.mxu0 0.0
        %653 = vmatpush1.msra.mxu0 0.0
        %654 = vmatprep.subr.mxu0 0.0
        %655 = vmatpush1.msra.mxu0 0.0
        %656 = vmatprep.mubr.f32.mxu0 0.0
        %657 = vmatmul.mubr.f32.gmra.mrb[0].mxu0 %v456
        %v658 = vpop.f32.mrb[0].mxu0
        %v659 = vadd.f32 %v445, %v658
        %v660 = vpop.f32.mrb[0].mxu0
        %v661 = vadd.f32 %v449, %v660
        %662 = vmatprep.mubr.f32.mxu0 0.0
        %663 = vmatmul.mubr.f32.gmra.mrb[0].mxu0 %v459
        %v664 = vpop.f32.mrb[0].mxu0
        %v665 = vadd.f32 %v445, %v664
        %v666 = vpop.f32.mrb[0].mxu0
        %v667 = vadd.f32 %v449, %v666
        %668 = vmatprep.mubr.f32.mxu0 0.0
        %669 = vmatmul.mubr.f32.gmra.mrb[0].mxu0 %v462
        %v670 = vpop.f32.mrb[0].mxu0
        %v671 = vadd.f32 %v445, %v670
        %v672 = vpop.f32.mrb[0].mxu0
        %v673 = vadd.f32 %v449, %v672
        %674 = vmatprep.mubr.f32.mxu0 0.0
        %675 = vmatmul.mubr.f32.gmra.mrb[0].mxu0 %v465
        %v676 = vpop.f32.mrb[0].mxu0
        %v677 = vadd.f32 %v445, %v676
        %v678 = vpop.f32.mrb[0].mxu0
        %v679 = vadd.f32 %v449, %v678
        %680 = vmatprep.mubr.f32.mxu0 0.0
        %681 = vmatmul.mubr.f32.gmra.mrb[0].mxu0 %v468
        %v682 = vpop.f32.mrb[0].mxu0
        %v683 = vadd.f32 %v445, %v682
        %v684 = vpop.f32.mrb[0].mxu0
        %v685 = vadd.f32 %v449, %v684
        %686 = vmatprep.mubr.f32.mxu0 0.0
        %687 = vmatmul.mubr.f32.gmra.mrb[0].mxu0 %v471
        %v688 = vpop.f32.mrb[0].mxu0
        %v689 = vadd.f32 %v445, %v688
        %v690 = vpop.f32.mrb[0].mxu0
        %v691 = vadd.f32 %v449, %v690
        %692 = vmatprep.mubr.f32.mxu0 0.0
        %693 = vmatmul.mubr.f32.gmra.mrb[0].mxu0 %v474
        %v694 = vpop.f32.mrb[0].mxu0
        %v695 = vadd.f32 %v445, %v694
        %v696 = vpop.f32.mrb[0].mxu0
        %v697 = vadd.f32 %v449, %v696
        %698 = vmatprep.mubr.f32.mxu0 0.0
        %699 = vmatmul.mubr.f32.gmra.mrb[0].mxu0 %v477
        %v700 = vpop.f32.mrb[0].mxu0
        %v701 = vadd.f32 %v445, %v700
        %v702 = vpop.f32.mrb[0].mxu0
        %v703 = vadd.f32 %v449, %v702
        %704 = vdwg.mxu0
        %v705 = vld [vmem:[#allocation6] sm:$0xff]
        %v706 = vld [vmem:[#allocation6 + $0x8] sm:$0xff]
        %v707 = vld [vmem:[#allocation6 + $0x10] sm:$0xff]
        %v708 = vld [vmem:[#allocation6 + $0x18] sm:$0xff]
        %v709 = vld [vmem:[#allocation6 + $0x20] sm:$0xff]
        %v710 = vld [vmem:[#allocation6 + $0x28] sm:$0xff]
        %v711 = vld [vmem:[#allocation6 + $0x30] sm:$0xff]
        %v712 = vld [vmem:[#allocation6 + $0x38] sm:$0xff]
        %v713 = vld [vmem:[#allocation6 + $0x40] sm:$0xff]
        %v714 = vld [vmem:[#allocation6 + $0x48] sm:$0xff]
        %v715 = vld [vmem:[#allocation6 + $0x50] sm:$0xff]
        %v716 = vld [vmem:[#allocation6 + $0x58] sm:$0xff]
        %v717 = vld [vmem:[#allocation6 + $0x60] sm:$0xff]
        %v718 = vld [vmem:[#allocation6 + $0x68] sm:$0xff]
        %v719 = vld [vmem:[#allocation6 + $0x70] sm:$0xff]
        %v720 = vld [vmem:[#allocation6 + $0x78] sm:$0xff]
        %v721 = vld [vmem:[#allocation6 + $0x80] sm:$0xff]
        %v722 = vld [vmem:[#allocation6 + $0x88] sm:$0xff]
        %v723 = vld [vmem:[#allocation6 + $0x90] sm:$0xff]
        %v724 = vld [vmem:[#allocation6 + $0x98] sm:$0xff]
        %v725 = vld [vmem:[#allocation6 + $0xa0] sm:$0xff]
        %v726 = vld [vmem:[#allocation6 + $0xa8] sm:$0xff]
        %v727 = vld [vmem:[#allocation6 + $0xb0] sm:$0xff]
        %v728 = vld [vmem:[#allocation6 + $0xb8] sm:$0xff]
        %v729 = vld [vmem:[#allocation6 + $0xc0] sm:$0xff]
        %v730 = vld [vmem:[#allocation6 + $0xc8] sm:$0xff]
        %v731 = vld [vmem:[#allocation6 + $0xd0] sm:$0xff]
        %v732 = vld [vmem:[#allocation6 + $0xd8] sm:$0xff]
        %v733 = vld [vmem:[#allocation6 + $0xe0] sm:$0xff]
        %v734 = vld [vmem:[#allocation6 + $0xe8] sm:$0xff]
        %v735 = vld [vmem:[#allocation6 + $0xf0] sm:$0xff]
        %v736 = vld [vmem:[#allocation6 + $0xf8] sm:$0xff]
        %v737 = vld [vmem:[#allocation6 + $0x100] sm:$0xff]
        %v738 = vld [vmem:[#allocation6 + $0x108] sm:$0xff]
        %v739 = vld [vmem:[#allocation6 + $0x110] sm:$0xff]
        %v740 = vld [vmem:[#allocation6 + $0x118] sm:$0xff]
        %v741 = vld [vmem:[#allocation6 + $0x120] sm:$0xff]
        %v742 = vld [vmem:[#allocation6 + $0x128] sm:$0xff]
        %v743 = vld [vmem:[#allocation6 + $0x130] sm:$0xff]
        %v744 = vld [vmem:[#allocation6 + $0x138] sm:$0xff]
        %v745 = vld [vmem:[#allocation6 + $0x140] sm:$0xff]
        %v746 = vld [vmem:[#allocation6 + $0x148] sm:$0xff]
        %v747 = vld [vmem:[#allocation6 + $0x150] sm:$0xff]
        %v748 = vld [vmem:[#allocation6 + $0x158] sm:$0xff]
        %v749 = vld [vmem:[#allocation6 + $0x160] sm:$0xff]
        %v750 = vld [vmem:[#allocation6 + $0x168] sm:$0xff]
        %v751 = vld [vmem:[#allocation6 + $0x170] sm:$0xff]
        %v752 = vld [vmem:[#allocation6 + $0x178] sm:$0xff]
        %v753 = vld [vmem:[#allocation6 + $0x180] sm:$0xff]
        %v754 = vld [vmem:[#allocation6 + $0x188] sm:$0xff]
        %v755 = vld [vmem:[#allocation6 + $0x190] sm:$0xff]
        %v756 = vld [vmem:[#allocation6 + $0x198] sm:$0xff]
        %v757 = vld [vmem:[#allocation6 + $0x1a0] sm:$0xff]
        %v758 = vld [vmem:[#allocation6 + $0x1a8] sm:$0xff]
        %v759 = vld [vmem:[#allocation6 + $0x1b0] sm:$0xff]
        %v760 = vld [vmem:[#allocation6 + $0x1b8] sm:$0xff]
        %v761 = vld [vmem:[#allocation6 + $0x1c0] sm:$0xff]
        %v762 = vld [vmem:[#allocation6 + $0x1c8] sm:$0xff]
        %v763 = vld [vmem:[#allocation6 + $0x1d0] sm:$0xff]
        %v764 = vld [vmem:[#allocation6 + $0x1d8] sm:$0xff]
        %v765 = vld [vmem:[#allocation6 + $0x1e0] sm:$0xff]
        %v766 = vld [vmem:[#allocation6 + $0x1e8] sm:$0xff]
        %v767 = vld [vmem:[#allocation6 + $0x1f0] sm:$0xff]
        %v768 = vld [vmem:[#allocation6 + $0x1f8] sm:$0xff]
        %v769 = vld [vmem:[#allocation6 + $0x200] sm:$0xff]
        %v770 = vld [vmem:[#allocation6 + $0x208] sm:$0xff]
        %v771 = vld [vmem:[#allocation6 + $0x210] sm:$0xff]
        %v772 = vld [vmem:[#allocation6 + $0x218] sm:$0xff]
        %v773 = vld [vmem:[#allocation6 + $0x220] sm:$0xff]
        %v774 = vld [vmem:[#allocation6 + $0x228] sm:$0xff]
        %v775 = vld [vmem:[#allocation6 + $0x230] sm:$0xff]
        %v776 = vld [vmem:[#allocation6 + $0x238] sm:$0xff]
        %v777 = vld [vmem:[#allocation6 + $0x240] sm:$0xff]
        %v778 = vld [vmem:[#allocation6 + $0x248] sm:$0xff]
        %v779 = vld [vmem:[#allocation6 + $0x250] sm:$0xff]
        %v780 = vld [vmem:[#allocation6 + $0x258] sm:$0xff]
        %v781 = vld [vmem:[#allocation6 + $0x260] sm:$0xff]
        %v782 = vld [vmem:[#allocation6 + $0x268] sm:$0xff]
        %v783 = vld [vmem:[#allocation6 + $0x270] sm:$0xff]
        %v784 = vld [vmem:[#allocation6 + $0x278] sm:$0xff]
        %v785 = vld [vmem:[#allocation6 + $0x280] sm:$0xff]
        %v786 = vld [vmem:[#allocation6 + $0x288] sm:$0xff]
        %v787 = vld [vmem:[#allocation6 + $0x290] sm:$0xff]
        %v788 = vld [vmem:[#allocation6 + $0x298] sm:$0xff]
        %v789 = vld [vmem:[#allocation6 + $0x2a0] sm:$0xff]
        %v790 = vld [vmem:[#allocation6 + $0x2a8] sm:$0xff]
        %v791 = vld [vmem:[#allocation6 + $0x2b0] sm:$0xff]
        %v792 = vld [vmem:[#allocation6 + $0x2b8] sm:$0xff]
        %v793 = vld [vmem:[#allocation6 + $0x2c0] sm:$0xff]
        %v794 = vld [vmem:[#allocation6 + $0x2c8] sm:$0xff]
        %v795 = vld [vmem:[#allocation6 + $0x2d0] sm:$0xff]
        %v796 = vld [vmem:[#allocation6 + $0x2d8] sm:$0xff]
        %v797 = vld [vmem:[#allocation6 + $0x2e0] sm:$0xff]
        %v798 = vld [vmem:[#allocation6 + $0x2e8] sm:$0xff]
        %v799 = vld [vmem:[#allocation6 + $0x2f0] sm:$0xff]
        %v800 = vld [vmem:[#allocation6 + $0x2f8] sm:$0xff]
        %v801 = vld [vmem:[#allocation6 + $0x300] sm:$0xff]
        %v802 = vld [vmem:[#allocation6 + $0x308] sm:$0xff]
        %v803 = vld [vmem:[#allocation6 + $0x310] sm:$0xff]
        %v804 = vld [vmem:[#allocation6 + $0x318] sm:$0xff]
        %v805 = vld [vmem:[#allocation6 + $0x320] sm:$0xff]
        %v806 = vld [vmem:[#allocation6 + $0x328] sm:$0xff]
        %v807 = vld [vmem:[#allocation6 + $0x330] sm:$0xff]
        %v808 = vld [vmem:[#allocation6 + $0x338] sm:$0xff]
        %v809 = vld [vmem:[#allocation6 + $0x340] sm:$0xff]
        %v810 = vld [vmem:[#allocation6 + $0x348] sm:$0xff]
        %v811 = vld [vmem:[#allocation6 + $0x350] sm:$0xff]
        %v812 = vld [vmem:[#allocation6 + $0x358] sm:$0xff]
        %v813 = vld [vmem:[#allocation6 + $0x360] sm:$0xff]
        %v814 = vld [vmem:[#allocation6 + $0x368] sm:$0xff]
        %v815 = vld [vmem:[#allocation6 + $0x370] sm:$0xff]
        %v816 = vld [vmem:[#allocation6 + $0x378] sm:$0xff]
        %v817 = vld [vmem:[#allocation6 + $0x380] sm:$0xff]
        %v818 = vld [vmem:[#allocation6 + $0x388] sm:$0xff]
        %v819 = vld [vmem:[#allocation6 + $0x390] sm:$0xff]
        %v820 = vld [vmem:[#allocation6 + $0x398] sm:$0xff]
        %v821 = vld [vmem:[#allocation6 + $0x3a0] sm:$0xff]
        %v822 = vld [vmem:[#allocation6 + $0x3a8] sm:$0xff]
        %v823 = vld [vmem:[#allocation6 + $0x3b0] sm:$0xff]
        %v824 = vld [vmem:[#allocation6 + $0x3b8] sm:$0xff]
        %v825 = vld [vmem:[#allocation6 + $0x3c0] sm:$0xff]
        %v826 = vld [vmem:[#allocation6 + $0x3c8] sm:$0xff]
        %v827 = vld [vmem:[#allocation6 + $0x3d0] sm:$0xff]
        %v828 = vld [vmem:[#allocation6 + $0x3d8] sm:$0xff]
        %v829 = vld [vmem:[#allocation6 + $0x3e0] sm:$0xff]
        %v830 = vld [vmem:[#allocation6 + $0x3e8] sm:$0xff]
        %v831 = vld [vmem:[#allocation6 + $0x3f0] sm:$0xff]
        %v832 = vld [vmem:[#allocation6 + $0x3f8] sm:$0xff]
        %v833 = vld [vmem:[%s4] sm:$0x3]
        %v835 = vlaneseq
        %v836 = vshrl.u32 %v835, 7
        %v837 = vsub.s32 0, %v836
        %v838 = vrot.slane %v833, %v837
        %v839 = vlaneseq
        %v840 = vshrl.u32 %v839, 7
        %v841 = vsub.s32 1, %v840
        %v842 = vrot.slane %v833, %v841
        %845 = vmatprep.subr.mxu0 %v706
        %846 = vmatpush1.msra.mxu0 %v705
        %847 = vmatprep.subr.mxu0 %v708
        %848 = vmatpush1.msra.mxu0 %v707
        %849 = vmatprep.subr.mxu0 %v710
        %850 = vmatpush1.msra.mxu0 %v709
        %851 = vmatprep.subr.mxu0 %v712
        %852 = vmatpush1.msra.mxu0 %v711
        %853 = vmatprep.subr.mxu0 %v714
        %854 = vmatpush1.msra.mxu0 %v713
        %855 = vmatprep.subr.mxu0 %v716
        %856 = vmatpush1.msra.mxu0 %v715
        %857 = vmatprep.subr.mxu0 %v718
        %858 = vmatpush1.msra.mxu0 %v717
        %859 = vmatprep.subr.mxu0 %v720
        %860 = vmatpush1.msra.mxu0 %v719
        %861 = vmatprep.subr.mxu0 %v722
        %862 = vmatpush1.msra.mxu0 %v721
        %863 = vmatprep.subr.mxu0 %v724
        %864 = vmatpush1.msra.mxu0 %v723
        %865 = vmatprep.subr.mxu0 %v726
        %866 = vmatpush1.msra.mxu0 %v725
        %867 = vmatprep.subr.mxu0 %v728
        %868 = vmatpush1.msra.mxu0 %v727
        %869 = vmatprep.subr.mxu0 %v730
        %870 = vmatpush1.msra.mxu0 %v729
        %871 = vmatprep.subr.mxu0 %v732
        %872 = vmatpush1.msra.mxu0 %v731
        %873 = vmatprep.subr.mxu0 %v734
        %874 = vmatpush1.msra.mxu0 %v733
        %875 = vmatprep.subr.mxu0 %v736
        %876 = vmatpush1.msra.mxu0 %v735
        %877 = vmatprep.subr.mxu0 %v738
        %878 = vmatpush1.msra.mxu0 %v737
        %879 = vmatprep.subr.mxu0 %v740
        %880 = vmatpush1.msra.mxu0 %v739
        %881 = vmatprep.subr.mxu0 %v742
        %882 = vmatpush1.msra.mxu0 %v741
        %883 = vmatprep.subr.mxu0 %v744
        %884 = vmatpush1.msra.mxu0 %v743
        %885 = vmatprep.subr.mxu0 %v746
        %886 = vmatpush1.msra.mxu0 %v745
        %887 = vmatprep.subr.mxu0 %v748
        %888 = vmatpush1.msra.mxu0 %v747
        %889 = vmatprep.subr.mxu0 %v750
        %890 = vmatpush1.msra.mxu0 %v749
        %891 = vmatprep.subr.mxu0 %v752
        %892 = vmatpush1.msra.mxu0 %v751
        %893 = vmatprep.subr.mxu0 %v754
        %894 = vmatpush1.msra.mxu0 %v753
        %895 = vmatprep.subr.mxu0 %v756
        %896 = vmatpush1.msra.mxu0 %v755
        %897 = vmatprep.subr.mxu0 %v758
        %898 = vmatpush1.msra.mxu0 %v757
        %899 = vmatprep.subr.mxu0 %v760
        %900 = vmatpush1.msra.mxu0 %v759
        %901 = vmatprep.subr.mxu0 %v762
        %902 = vmatpush1.msra.mxu0 %v761
        %903 = vmatprep.subr.mxu0 %v764
        %904 = vmatpush1.msra.mxu0 %v763
        %905 = vmatprep.subr.mxu0 %v766
        %906 = vmatpush1.msra.mxu0 %v765
        %907 = vmatprep.subr.mxu0 %v768
        %908 = vmatpush1.msra.mxu0 %v767
        %909 = vmatprep.mubr.f32.mxu0 %v548
        %910 = vmatmul.mubr.f32.gmra.mrb[0].mxu0 %v546
        %v911 = vpop.f32.mrb[0].mxu0
        %v912 = vadd.f32 %v838, %v911
        %v913 = vpop.f32.mrb[0].mxu0
        %v914 = vadd.f32 %v842, %v913
        %915 = vmatprep.mubr.f32.mxu0 %v554
        %916 = vmatmul.mubr.f32.gmra.mrb[0].mxu0 %v552
        %v917 = vpop.f32.mrb[0].mxu0
        %v918 = vadd.f32 %v838, %v917
        %v919 = vpop.f32.mrb[0].mxu0
        %v920 = vadd.f32 %v842, %v919
        %921 = vmatprep.mubr.f32.mxu0 %v560
        %922 = vmatmul.mubr.f32.gmra.mrb[0].mxu0 %v558
        %v923 = vpop.f32.mrb[0].mxu0
        %v924 = vadd.f32 %v838, %v923
        %v925 = vpop.f32.mrb[0].mxu0
        %v926 = vadd.f32 %v842, %v925
        %927 = vmatprep.mubr.f32.mxu0 %v566
        %928 = vmatmul.mubr.f32.gmra.mrb[0].mxu0 %v564
        %v929 = vpop.f32.mrb[0].mxu0
        %v930 = vadd.f32 %v838, %v929
        %v931 = vpop.f32.mrb[0].mxu0
        %v932 = vadd.f32 %v842, %v931
        %933 = vmatprep.mubr.f32.mxu0 %v572
        %934 = vmatmul.mubr.f32.gmra.mrb[0].mxu0 %v570
        %v935 = vpop.f32.mrb[0].mxu0
        %v936 = vadd.f32 %v838, %v935
        %v937 = vpop.f32.mrb[0].mxu0
        %v938 = vadd.f32 %v842, %v937
        %939 = vmatprep.mubr.f32.mxu0 %v578
        %940 = vmatmul.mubr.f32.gmra.mrb[0].mxu0 %v576
        %v941 = vpop.f32.mrb[0].mxu0
        %v942 = vadd.f32 %v838, %v941
        %v943 = vpop.f32.mrb[0].mxu0
        %v944 = vadd.f32 %v842, %v943
        %945 = vmatprep.mubr.f32.mxu0 %v584
        %946 = vmatmul.mubr.f32.gmra.mrb[0].mxu0 %v582
        %v947 = vpop.f32.mrb[0].mxu0
        %v948 = vadd.f32 %v838, %v947
        %v949 = vpop.f32.mrb[0].mxu0
        %v950 = vadd.f32 %v842, %v949
        %951 = vmatprep.mubr.f32.mxu0 %v590
        %952 = vmatmul.mubr.f32.gmra.mrb[0].mxu0 %v588
        %v953 = vpop.f32.mrb[0].mxu0
        %v954 = vadd.f32 %v838, %v953
        %v955 = vpop.f32.mrb[0].mxu0
        %v956 = vadd.f32 %v842, %v955
        %957 = vdwg.mxu0
        %958 = vmatprep.subr.mxu0 %v770
        %959 = vmatpush1.msra.mxu0 %v769
        %960 = vmatprep.subr.mxu0 %v772
        %961 = vmatpush1.msra.mxu0 %v771
        %962 = vmatprep.subr.mxu0 %v774
        %963 = vmatpush1.msra.mxu0 %v773
        %964 = vmatprep.subr.mxu0 %v776
        %965 = vmatpush1.msra.mxu0 %v775
        %966 = vmatprep.subr.mxu0 %v778
        %967 = vmatpush1.msra.mxu0 %v777
        %968 = vmatprep.subr.mxu0 %v780
        %969 = vmatpush1.msra.mxu0 %v779
        %970 = vmatprep.subr.mxu0 %v782
        %971 = vmatpush1.msra.mxu0 %v781
        %972 = vmatprep.subr.mxu0 %v784
        %973 = vmatpush1.msra.mxu0 %v783
        %974 = vmatprep.subr.mxu0 %v786
        %975 = vmatpush1.msra.mxu0 %v785
        %976 = vmatprep.subr.mxu0 %v788
        %977 = vmatpush1.msra.mxu0 %v787
        %978 = vmatprep.subr.mxu0 %v790
        %979 = vmatpush1.msra.mxu0 %v789
        %980 = vmatprep.subr.mxu0 %v792
        %981 = vmatpush1.msra.mxu0 %v791
        %982 = vmatprep.subr.mxu0 %v794
        %983 = vmatpush1.msra.mxu0 %v793
        %984 = vmatprep.subr.mxu0 %v796
        %985 = vmatpush1.msra.mxu0 %v795
        %986 = vmatprep.subr.mxu0 %v798
        %987 = vmatpush1.msra.mxu0 %v797
        %988 = vmatprep.subr.mxu0 %v800
        %989 = vmatpush1.msra.mxu0 %v799
        %990 = vmatprep.subr.mxu0 %v802
        %991 = vmatpush1.msra.mxu0 %v801
        %992 = vmatprep.subr.mxu0 %v804
        %993 = vmatpush1.msra.mxu0 %v803
        %994 = vmatprep.subr.mxu0 %v806
        %995 = vmatpush1.msra.mxu0 %v805
        %996 = vmatprep.subr.mxu0 %v808
        %997 = vmatpush1.msra.mxu0 %v807
        %998 = vmatprep.subr.mxu0 %v810
        %999 = vmatpush1.msra.mxu0 %v809
        %1000 = vmatprep.subr.mxu0 %v812
        %1001 = vmatpush1.msra.mxu0 %v811
        %1002 = vmatprep.subr.mxu0 %v814
        %1003 = vmatpush1.msra.mxu0 %v813
        %1004 = vmatprep.subr.mxu0 %v816
        %1005 = vmatpush1.msra.mxu0 %v815
        %1006 = vmatprep.subr.mxu0 %v818
        %1007 = vmatpush1.msra.mxu0 %v817
        %1008 = vmatprep.subr.mxu0 %v820
        %1009 = vmatpush1.msra.mxu0 %v819
        %1010 = vmatprep.subr.mxu0 %v822
        %1011 = vmatpush1.msra.mxu0 %v821
        %1012 = vmatprep.subr.mxu0 %v824
        %1013 = vmatpush1.msra.mxu0 %v823
        %1014 = vmatprep.subr.mxu0 %v826
        %1015 = vmatpush1.msra.mxu0 %v825
        %1016 = vmatprep.subr.mxu0 %v828
        %1017 = vmatpush1.msra.mxu0 %v827
        %1018 = vmatprep.subr.mxu0 %v830
        %1019 = vmatpush1.msra.mxu0 %v829
        %1020 = vmatprep.subr.mxu0 %v832
        %1021 = vmatpush1.msra.mxu0 %v831
        %1022 = vmatprep.mubr.f32.mxu0 %v661
        %1023 = vmatmul.mubr.f32.gmra.mrb[0].mxu0 %v659
        %v1024 = vpop.f32.mrb[0].mxu0
        %v1025 = vadd.f32 %v912, %v1024
        %v1026 = vpop.f32.mrb[0].mxu0
        %v1027 = vadd.f32 %v914, %v1026
        %1028 = vmatprep.mubr.f32.mxu0 %v667
        %1029 = vmatmul.mubr.f32.gmra.mrb[0].mxu0 %v665
        %v1030 = vpop.f32.mrb[0].mxu0
        %v1031 = vadd.f32 %v918, %v1030
        %v1032 = vpop.f32.mrb[0].mxu0
        %v1033 = vadd.f32 %v920, %v1032
        %1034 = vmatprep.mubr.f32.mxu0 %v673
        %1035 = vmatmul.mubr.f32.gmra.mrb[0].mxu0 %v671
        %v1036 = vpop.f32.mrb[0].mxu0
        %v1037 = vadd.f32 %v924, %v1036
        %v1038 = vpop.f32.mrb[0].mxu0
        %v1039 = vadd.f32 %v926, %v1038
        %1040 = vmatprep.mubr.f32.mxu0 %v679
        %1041 = vmatmul.mubr.f32.gmra.mrb[0].mxu0 %v677
        %v1042 = vpop.f32.mrb[0].mxu0
        %v1043 = vadd.f32 %v930, %v1042
        %v1044 = vpop.f32.mrb[0].mxu0
        %v1045 = vadd.f32 %v932, %v1044
        %1046 = vmatprep.mubr.f32.mxu0 %v685
        %1047 = vmatmul.mubr.f32.gmra.mrb[0].mxu0 %v683
        %v1048 = vpop.f32.mrb[0].mxu0
        %v1049 = vadd.f32 %v936, %v1048
        %v1050 = vpop.f32.mrb[0].mxu0
        %v1051 = vadd.f32 %v938, %v1050
        %1052 = vmatprep.mubr.f32.mxu0 %v691
        %1053 = vmatmul.mubr.f32.gmra.mrb[0].mxu0 %v689
        %v1054 = vpop.f32.mrb[0].mxu0
        %v1055 = vadd.f32 %v942, %v1054
        %v1056 = vpop.f32.mrb[0].mxu0
        %v1057 = vadd.f32 %v944, %v1056
        %1058 = vmatprep.mubr.f32.mxu0 %v697
        %1059 = vmatmul.mubr.f32.gmra.mrb[0].mxu0 %v695
        %v1060 = vpop.f32.mrb[0].mxu0
        %v1061 = vadd.f32 %v948, %v1060
        %v1062 = vpop.f32.mrb[0].mxu0
        %v1063 = vadd.f32 %v950, %v1062
        %1064 = vmatprep.mubr.f32.mxu0 %v703
        %1065 = vmatmul.mubr.f32.gmra.mrb[0].mxu0 %v701
        %v1066 = vpop.f32.mrb[0].mxu0
        %v1067 = vadd.f32 %v954, %v1066
        %v1068 = vpop.f32.mrb[0].mxu0
        %v1069 = vadd.f32 %v956, %v1068
        %1070 = vdwg.mxu0
        %v1071 = vld [vmem:[#allocation8] sm:$0xff]
        %v1072 = vld [vmem:[#allocation8 + $0x8] sm:$0xff]
        %v1073 = vld [vmem:[#allocation8 + $0x10] sm:$0xff]
        %v1074 = vld [vmem:[#allocation8 + $0x18] sm:$0xff]
        %v1075 = vld [vmem:[#allocation8 + $0x20] sm:$0xff]
        %v1076 = vld [vmem:[#allocation8 + $0x28] sm:$0xff]
        %v1077 = vld [vmem:[#allocation8 + $0x30] sm:$0xff]
        %v1078 = vld [vmem:[#allocation8 + $0x38] sm:$0xff]
        %v1079 = vld [vmem:[#allocation8 + $0x40] sm:$0xff]
        %v1080 = vld [vmem:[#allocation8 + $0x48] sm:$0xff]
        %v1081 = vld [vmem:[#allocation8 + $0x50] sm:$0xff]
        %v1082 = vld [vmem:[#allocation8 + $0x58] sm:$0xff]
        %v1083 = vld [vmem:[#allocation8 + $0x60] sm:$0xff]
        %v1084 = vld [vmem:[#allocation8 + $0x68] sm:$0xff]
        %v1085 = vld [vmem:[#allocation8 + $0x70] sm:$0xff]
        %v1086 = vld [vmem:[#allocation8 + $0x78] sm:$0xff]
        %v1087 = vld [vmem:[#allocation8 + $0x80] sm:$0xff]
        %v1088 = vld [vmem:[#allocation8 + $0x88] sm:$0xff]
        %v1089 = vld [vmem:[#allocation8 + $0x90] sm:$0xff]
        %v1090 = vld [vmem:[#allocation8 + $0x98] sm:$0xff]
        %v1091 = vld [vmem:[#allocation8 + $0xa0] sm:$0xff]
        %v1092 = vld [vmem:[#allocation8 + $0xa8] sm:$0xff]
        %v1093 = vld [vmem:[#allocation8 + $0xb0] sm:$0xff]
        %v1094 = vld [vmem:[#allocation8 + $0xb8] sm:$0xff]
        %v1095 = vld [vmem:[#allocation8 + $0xc0] sm:$0xff]
        %v1096 = vld [vmem:[#allocation8 + $0xc8] sm:$0xff]
        %v1097 = vld [vmem:[#allocation8 + $0xd0] sm:$0xff]
        %v1098 = vld [vmem:[#allocation8 + $0xd8] sm:$0xff]
        %v1099 = vld [vmem:[#allocation8 + $0xe0] sm:$0xff]
        %v1100 = vld [vmem:[#allocation8 + $0xe8] sm:$0xff]
        %v1101 = vld [vmem:[#allocation8 + $0xf0] sm:$0xff]
        %v1102 = vld [vmem:[#allocation8 + $0xf8] sm:$0xff]
        %v1103 = vld [vmem:[%s6] sm:$0x1]
        %v1105 = vlaneseq
        %v1106 = vshrl.u32 %v1105, 7
        %v1107 = vsub.s32 0, %v1106
        %v1108 = vrot.slane %v1103, %v1107
        %1110 = vmatprep.subr.mxu0 0.0
        %1111 = vmatpush1.msra.mxu0 %v1071
        %1112 = vmatprep.subr.mxu0 0.0
        %1113 = vmatpush1.msra.mxu0 %v1072
        %1114 = vmatprep.subr.mxu0 0.0
        %1115 = vmatpush1.msra.mxu0 %v1073
        %1116 = vmatprep.subr.mxu0 0.0
        %1117 = vmatpush1.msra.mxu0 %v1074
        %1118 = vmatprep.subr.mxu0 0.0
        %1119 = vmatpush1.msra.mxu0 %v1075
        %1120 = vmatprep.subr.mxu0 0.0
        %1121 = vmatpush1.msra.mxu0 %v1076
        %1122 = vmatprep.subr.mxu0 0.0
        %1123 = vmatpush1.msra.mxu0 %v1077
        %1124 = vmatprep.subr.mxu0 0.0
        %1125 = vmatpush1.msra.mxu0 %v1078
        %1126 = vmatprep.subr.mxu0 0.0
        %1127 = vmatpush1.msra.mxu0 %v1079
        %1128 = vmatprep.subr.mxu0 0.0
        %1129 = vmatpush1.msra.mxu0 %v1080
        %1130 = vmatprep.subr.mxu0 0.0
        %1131 = vmatpush1.msra.mxu0 %v1081
        %1132 = vmatprep.subr.mxu0 0.0
        %1133 = vmatpush1.msra.mxu0 %v1082
        %1134 = vmatprep.subr.mxu0 0.0
        %1135 = vmatpush1.msra.mxu0 %v1083
        %1136 = vmatprep.subr.mxu0 0.0
        %1137 = vmatpush1.msra.mxu0 %v1084
        %1138 = vmatprep.subr.mxu0 0.0
        %1139 = vmatpush1.msra.mxu0 %v1085
        %1140 = vmatprep.subr.mxu0 0.0
        %1141 = vmatpush1.msra.mxu0 %v1086
        %1142 = vmatprep.subr.mxu0 0.0
        %1143 = vmatpush1.msra.mxu0 %v1087
        %1144 = vmatprep.subr.mxu0 0.0
        %1145 = vmatpush1.msra.mxu0 %v1088
        %1146 = vmatprep.subr.mxu0 0.0
        %1147 = vmatpush1.msra.mxu0 %v1089
        %1148 = vmatprep.subr.mxu0 0.0
        %1149 = vmatpush1.msra.mxu0 %v1090
        %1150 = vmatprep.subr.mxu0 0.0
        %1151 = vmatpush1.msra.mxu0 %v1091
        %1152 = vmatprep.subr.mxu0 0.0
        %1153 = vmatpush1.msra.mxu0 %v1092
        %1154 = vmatprep.subr.mxu0 0.0
        %1155 = vmatpush1.msra.mxu0 %v1093
        %1156 = vmatprep.subr.mxu0 0.0
        %1157 = vmatpush1.msra.mxu0 %v1094
        %1158 = vmatprep.subr.mxu0 0.0
        %1159 = vmatpush1.msra.mxu0 %v1095
        %1160 = vmatprep.subr.mxu0 0.0
        %1161 = vmatpush1.msra.mxu0 %v1096
        %1162 = vmatprep.subr.mxu0 0.0
        %1163 = vmatpush1.msra.mxu0 %v1097
        %1164 = vmatprep.subr.mxu0 0.0
        %1165 = vmatpush1.msra.mxu0 %v1098
        %1166 = vmatprep.subr.mxu0 0.0
        %1167 = vmatpush1.msra.mxu0 %v1099
        %1168 = vmatprep.subr.mxu0 0.0
        %1169 = vmatpush1.msra.mxu0 %v1100
        %1170 = vmatprep.subr.mxu0 0.0
        %1171 = vmatpush1.msra.mxu0 %v1101
        %1172 = vmatprep.subr.mxu0 0.0
        %1173 = vmatpush1.msra.mxu0 %v1102
        %1174 = vmatprep.mubr.f32.mxu0 %v1027
        %1175 = vmatmul.mubr.f32.gmra.mrb[0].mxu0 %v1025
        %v1176 = vpop.f32.mrb[0].mxu0
        %v1177 = vadd.f32 %v1108, %v1176
        %v1178 = vpop.f32.mrb[0].mxu0
        %1179 = vmatprep.mubr.f32.mxu0 %v1033
        %1180 = vmatmul.mubr.f32.gmra.mrb[0].mxu0 %v1031
        %v1181 = vpop.f32.mrb[0].mxu0
        %v1182 = vadd.f32 %v1108, %v1181
        %v1183 = vpop.f32.mrb[0].mxu0
        %1184 = vmatprep.mubr.f32.mxu0 %v1039
        %1185 = vmatmul.mubr.f32.gmra.mrb[0].mxu0 %v1037
        %v1186 = vpop.f32.mrb[0].mxu0
        %v1187 = vadd.f32 %v1108, %v1186
        %v1188 = vpop.f32.mrb[0].mxu0
        %1189 = vmatprep.mubr.f32.mxu0 %v1045
        %1190 = vmatmul.mubr.f32.gmra.mrb[0].mxu0 %v1043
        %v1191 = vpop.f32.mrb[0].mxu0
        %v1192 = vadd.f32 %v1108, %v1191
        %v1193 = vpop.f32.mrb[0].mxu0
        %1194 = vmatprep.mubr.f32.mxu0 %v1051
        %1195 = vmatmul.mubr.f32.gmra.mrb[0].mxu0 %v1049
        %v1196 = vpop.f32.mrb[0].mxu0
        %v1197 = vadd.f32 %v1108, %v1196
        %v1198 = vpop.f32.mrb[0].mxu0
        %1199 = vmatprep.mubr.f32.mxu0 %v1057
        %1200 = vmatmul.mubr.f32.gmra.mrb[0].mxu0 %v1055
        %v1201 = vpop.f32.mrb[0].mxu0
        %v1202 = vadd.f32 %v1108, %v1201
        %v1203 = vpop.f32.mrb[0].mxu0
        %1204 = vmatprep.mubr.f32.mxu0 %v1063
        %1205 = vmatmul.mubr.f32.gmra.mrb[0].mxu0 %v1061
        %v1206 = vpop.f32.mrb[0].mxu0
        %v1207 = vadd.f32 %v1108, %v1206
        %v1208 = vpop.f32.mrb[0].mxu0
        %1209 = vmatprep.mubr.f32.mxu0 %v1069
        %1210 = vmatmul.mubr.f32.gmra.mrb[0].mxu0 %v1067
        %v1211 = vpop.f32.mrb[0].mxu0
        %v1212 = vadd.f32 %v1108, %v1211
        %v1213 = vpop.f32.mrb[0].mxu0
        %1214 = vdwg.mxu0
        %1215 = vst [vmem:[#allocation2] sm:$0xff] %v1177
        %1216 = vst [vmem:[#allocation2 + $0x8] sm:$0xff] %v1182
        %1217 = vst [vmem:[#allocation2 + $0x10] sm:$0xff] %v1187
        %1218 = vst [vmem:[#allocation2 + $0x18] sm:$0xff] %v1192
        %1219 = vst [vmem:[#allocation2 + $0x20] sm:$0xff] %v1197
        %1220 = vst [vmem:[#allocation2 + $0x28] sm:$0xff] %v1202
        %1221 = vst [vmem:[#allocation2 + $0x30] sm:$0xff] %v1207
        %1222 = vst [vmem:[#allocation2 + $0x38] sm:$0xff] %v1212
        %v1223 = vld [vmem:[#allocation2] ss:$8 sm:$0xf]
        %v1224 = vld [vmem:[#allocation2] ss:$8 sm:$0xf0]
        %v1225 = vor.u32 %v1223, %v1224
        %v1226 = vld [vmem:[#allocation9] sm:$0xff]
        %v1227 = vld [vmem:[#allocation9 + $0x8] sm:$0xff]
        %v1228 = vld [vmem:[#allocation9 + $0x10] sm:$0xff]
        %v1229 = vld [vmem:[#allocation9 + $0x18] sm:$0xff]
        %v1230 = vld [vmem:[#allocation9 + $0x20] sm:$0xff]
        %v1231 = vld [vmem:[#allocation9 + $0x28] sm:$0xff]
        %v1232 = vld [vmem:[#allocation9 + $0x30] sm:$0xff]
        %v1233 = vld [vmem:[#allocation9 + $0x38] sm:$0xff]
        %v1234 = vld [vmem:[#allocation9 + $0x40] sm:$0xff]
        %v1235 = vld [vmem:[#allocation9 + $0x48] sm:$0xff]
        %v1236 = vld [vmem:[#allocation9 + $0x50] sm:$0xff]
        %v1237 = vld [vmem:[#allocation9 + $0x58] sm:$0xff]
        %v1238 = vld [vmem:[#allocation9 + $0x60] sm:$0xff]
        %v1239 = vld [vmem:[#allocation9 + $0x68] sm:$0xff]
        %v1240 = vld [vmem:[#allocation9 + $0x70] sm:$0xff]
        %v1241 = vld [vmem:[#allocation9 + $0x78] sm:$0xff]
        %s1242 = scalar_lea.vmem [#allocation2], 1
        %v1243 = vld [vmem:[%s1242] ss:$8 sm:$0xf]
        %v1244 = vld [vmem:[%s1242] ss:$8 sm:$0xf0]
        %v1245 = vor.u32 %v1243, %v1244
        %s1246 = scalar_lea.vmem [#allocation9], 128
        %v1247 = vld [vmem:[%s1246] sm:$0xff]
        %v1248 = vld [vmem:[%s1246 + $0x8] sm:$0xff]
        %v1249 = vld [vmem:[%s1246 + $0x10] sm:$0xff]
        %v1250 = vld [vmem:[%s1246 + $0x18] sm:$0xff]
        %v1251 = vld [vmem:[%s1246 + $0x20] sm:$0xff]
        %v1252 = vld [vmem:[%s1246 + $0x28] sm:$0xff]
        %v1253 = vld [vmem:[%s1246 + $0x30] sm:$0xff]
        %v1254 = vld [vmem:[%s1246 + $0x38] sm:$0xff]
        %v1255 = vld [vmem:[%s1246 + $0x40] sm:$0xff]
        %v1256 = vld [vmem:[%s1246 + $0x48] sm:$0xff]
        %v1257 = vld [vmem:[%s1246 + $0x50] sm:$0xff]
        %v1258 = vld [vmem:[%s1246 + $0x58] sm:$0xff]
        %v1259 = vld [vmem:[%s1246 + $0x60] sm:$0xff]
        %v1260 = vld [vmem:[%s1246 + $0x68] sm:$0xff]
        %v1261 = vld [vmem:[%s1246 + $0x70] sm:$0xff]
        %v1262 = vld [vmem:[%s1246 + $0x78] sm:$0xff]
        %1263 = vmatprep.subr.mxu0 0.0
        %1264 = vmatpush1.msra.mxu0 %v1247
        %1265 = vmatprep.subr.mxu0 0.0
        %1266 = vmatpush1.msra.mxu0 %v1248
        %1267 = vmatprep.subr.mxu0 0.0
        %1268 = vmatpush1.msra.mxu0 %v1249
        %1269 = vmatprep.subr.mxu0 0.0
        %1270 = vmatpush1.msra.mxu0 %v1250
        %1271 = vmatprep.subr.mxu0 0.0
        %1272 = vmatpush1.msra.mxu0 %v1251
        %1273 = vmatprep.subr.mxu0 0.0
        %1274 = vmatpush1.msra.mxu0 %v1252
        %1275 = vmatprep.subr.mxu0 0.0
        %1276 = vmatpush1.msra.mxu0 %v1253
        %1277 = vmatprep.subr.mxu0 0.0
        %1278 = vmatpush1.msra.mxu0 %v1254
        %1279 = vmatprep.subr.mxu0 0.0
        %1280 = vmatpush1.msra.mxu0 %v1255
        %1281 = vmatprep.subr.mxu0 0.0
        %1282 = vmatpush1.msra.mxu0 %v1256
        %1283 = vmatprep.subr.mxu0 0.0
        %1284 = vmatpush1.msra.mxu0 %v1257
        %1285 = vmatprep.subr.mxu0 0.0
        %1286 = vmatpush1.msra.mxu0 %v1258
        %1287 = vmatprep.subr.mxu0 0.0
        %1288 = vmatpush1.msra.mxu0 %v1259
        %1289 = vmatprep.subr.mxu0 0.0
        %1290 = vmatpush1.msra.mxu0 %v1260
        %1291 = vmatprep.subr.mxu0 0.0
        %1292 = vmatpush1.msra.mxu0 %v1261
        %1293 = vmatprep.subr.mxu0 0.0
        %1294 = vmatpush1.msra.mxu0 %v1262
        %1295 = vmatprep.subr.mxu0 0.0
        %1296 = vmatpush1.msra.mxu0 0.0
        %1297 = vmatprep.subr.mxu0 0.0
        %1298 = vmatpush1.msra.mxu0 0.0
        %1299 = vmatprep.subr.mxu0 0.0
        %1300 = vmatpush1.msra.mxu0 0.0
        %1301 = vmatprep.subr.mxu0 0.0
        %1302 = vmatpush1.msra.mxu0 0.0
        %1303 = vmatprep.subr.mxu0 0.0
        %1304 = vmatpush1.msra.mxu0 0.0
        %1305 = vmatprep.subr.mxu0 0.0
        %1306 = vmatpush1.msra.mxu0 0.0
        %1307 = vmatprep.subr.mxu0 0.0
        %1308 = vmatpush1.msra.mxu0 0.0
        %1309 = vmatprep.subr.mxu0 0.0
        %1310 = vmatpush1.msra.mxu0 0.0
        %1311 = vmatprep.subr.mxu0 0.0
        %1312 = vmatpush1.msra.mxu0 0.0
        %1313 = vmatprep.subr.mxu0 0.0
        %1314 = vmatpush1.msra.mxu0 0.0
        %1315 = vmatprep.subr.mxu0 0.0
        %1316 = vmatpush1.msra.mxu0 0.0
        %1317 = vmatprep.subr.mxu0 0.0
        %1318 = vmatpush1.msra.mxu0 0.0
        %1319 = vmatprep.subr.mxu0 0.0
        %1320 = vmatpush1.msra.mxu0 0.0
        %1321 = vmatprep.subr.mxu0 0.0
        %1322 = vmatpush1.msra.mxu0 0.0
        %1323 = vmatprep.subr.mxu0 0.0
        %1324 = vmatpush1.msra.mxu0 0.0
        %1325 = vmatprep.subr.mxu0 0.0
        %1326 = vmatpush1.msra.mxu0 0.0
        %1327 = vmatprep.mubr.f32.mxu0 0.0
        %1328 = vmatmul.mubr.f32.gmra.mrb[0].mxu0 %v1245
        %v1329 = vpop.f32.mrb[0].mxu0
        %v1330 = vadd.f32 0.0, %v1329
        %v1331 = vpop.f32.mrb[0].mxu0
        %1332 = vdwg.mxu0
        %1333 = vmatprep.subr.mxu0 0.0
        %1334 = vmatpush1.msra.mxu0 %v1226
        %1335 = vmatprep.subr.mxu0 0.0
        %1336 = vmatpush1.msra.mxu0 %v1227
        %1337 = vmatprep.subr.mxu0 0.0
        %1338 = vmatpush1.msra.mxu0 %v1228
        %1339 = vmatprep.subr.mxu0 0.0
        %1340 = vmatpush1.msra.mxu0 %v1229
        %1341 = vmatprep.subr.mxu0 0.0
        %1342 = vmatpush1.msra.mxu0 %v1230
        %1343 = vmatprep.subr.mxu0 0.0
        %1344 = vmatpush1.msra.mxu0 %v1231
        %1345 = vmatprep.subr.mxu0 0.0
        %1346 = vmatpush1.msra.mxu0 %v1232
        %1347 = vmatprep.subr.mxu0 0.0
        %1348 = vmatpush1.msra.mxu0 %v1233
        %1349 = vmatprep.subr.mxu0 0.0
        %1350 = vmatpush1.msra.mxu0 %v1234
        %1351 = vmatprep.subr.mxu0 0.0
        %1352 = vmatpush1.msra.mxu0 %v1235
        %1353 = vmatprep.subr.mxu0 0.0
        %1354 = vmatpush1.msra.mxu0 %v1236
        %1355 = vmatprep.subr.mxu0 0.0
        %1356 = vmatpush1.msra.mxu0 %v1237
        %1357 = vmatprep.subr.mxu0 0.0
        %1358 = vmatpush1.msra.mxu0 %v1238
        %1359 = vmatprep.subr.mxu0 0.0
        %1360 = vmatpush1.msra.mxu0 %v1239
        %1361 = vmatprep.subr.mxu0 0.0
        %1362 = vmatpush1.msra.mxu0 %v1240
        %1363 = vmatprep.subr.mxu0 0.0
        %1364 = vmatpush1.msra.mxu0 %v1241
        %1365 = vmatprep.subr.mxu0 0.0
        %1366 = vmatpush1.msra.mxu0 0.0
        %1367 = vmatprep.subr.mxu0 0.0
        %1368 = vmatpush1.msra.mxu0 0.0
        %1369 = vmatprep.subr.mxu0 0.0
        %1370 = vmatpush1.msra.mxu0 0.0
        %1371 = vmatprep.subr.mxu0 0.0
        %1372 = vmatpush1.msra.mxu0 0.0
        %1373 = vmatprep.subr.mxu0 0.0
        %1374 = vmatpush1.msra.mxu0 0.0
        %1375 = vmatprep.subr.mxu0 0.0
        %1376 = vmatpush1.msra.mxu0 0.0
        %1377 = vmatprep.subr.mxu0 0.0
        %1378 = vmatpush1.msra.mxu0 0.0
        %1379 = vmatprep.subr.mxu0 0.0
        %1380 = vmatpush1.msra.mxu0 0.0
        %1381 = vmatprep.subr.mxu0 0.0
        %1382 = vmatpush1.msra.mxu0 0.0
        %1383 = vmatprep.subr.mxu0 0.0
        %1384 = vmatpush1.msra.mxu0 0.0
        %1385 = vmatprep.subr.mxu0 0.0
        %1386 = vmatpush1.msra.mxu0 0.0
        %1387 = vmatprep.subr.mxu0 0.0
        %1388 = vmatpush1.msra.mxu0 0.0
        %1389 = vmatprep.subr.mxu0 0.0
        %1390 = vmatpush1.msra.mxu0 0.0
        %1391 = vmatprep.subr.mxu0 0.0
        %1392 = vmatpush1.msra.mxu0 0.0
        %1393 = vmatprep.subr.mxu0 0.0
        %1394 = vmatpush1.msra.mxu0 0.0
        %1395 = vmatprep.subr.mxu0 0.0
        %1396 = vmatpush1.msra.mxu0 0.0
        %1397 = vmatprep.mubr.f32.mxu0 0.0
        %1398 = vmatmul.mubr.f32.gmra.mrb[0].mxu0 %v1225
        %v1399 = vpop.f32.mrb[0].mxu0
        %v1400 = vadd.f32 %v1330, %v1399
        %v1401 = vpop.f32.mrb[0].mxu0
        %1402 = vdwg.mxu0
        %s1403 = scalar_lea.vmem [#allocation2], 2
        %v1404 = vld [vmem:[%s1403] ss:$8 sm:$0xf]
        %v1405 = vld [vmem:[%s1403] ss:$8 sm:$0xf0]
        %v1406 = vor.u32 %v1404, %v1405
        %s1407 = scalar_lea.vmem [#allocation9], 256
        %v1408 = vld [vmem:[%s1407] sm:$0xff]
        %v1409 = vld [vmem:[%s1407 + $0x8] sm:$0xff]
        %v1410 = vld [vmem:[%s1407 + $0x10] sm:$0xff]
        %v1411 = vld [vmem:[%s1407 + $0x18] sm:$0xff]
        %v1412 = vld [vmem:[%s1407 + $0x20] sm:$0xff]
        %v1413 = vld [vmem:[%s1407 + $0x28] sm:$0xff]
        %v1414 = vld [vmem:[%s1407 + $0x30] sm:$0xff]
        %v1415 = vld [vmem:[%s1407 + $0x38] sm:$0xff]
        %v1416 = vld [vmem:[%s1407 + $0x40] sm:$0xff]
        %v1417 = vld [vmem:[%s1407 + $0x48] sm:$0xff]
        %v1418 = vld [vmem:[%s1407 + $0x50] sm:$0xff]
        %v1419 = vld [vmem:[%s1407 + $0x58] sm:$0xff]
        %v1420 = vld [vmem:[%s1407 + $0x60] sm:$0xff]
        %v1421 = vld [vmem:[%s1407 + $0x68] sm:$0xff]
        %v1422 = vld [vmem:[%s1407 + $0x70] sm:$0xff]
        %v1423 = vld [vmem:[%s1407 + $0x78] sm:$0xff]
        %1424 = vmatprep.subr.mxu0 0.0
        %1425 = vmatpush1.msra.mxu0 %v1408
        %1426 = vmatprep.subr.mxu0 0.0
        %1427 = vmatpush1.msra.mxu0 %v1409
        %1428 = vmatprep.subr.mxu0 0.0
        %1429 = vmatpush1.msra.mxu0 %v1410
        %1430 = vmatprep.subr.mxu0 0.0
        %1431 = vmatpush1.msra.mxu0 %v1411
        %1432 = vmatprep.subr.mxu0 0.0
        %1433 = vmatpush1.msra.mxu0 %v1412
        %1434 = vmatprep.subr.mxu0 0.0
        %1435 = vmatpush1.msra.mxu0 %v1413
        %1436 = vmatprep.subr.mxu0 0.0
        %1437 = vmatpush1.msra.mxu0 %v1414
        %1438 = vmatprep.subr.mxu0 0.0
        %1439 = vmatpush1.msra.mxu0 %v1415
        %1440 = vmatprep.subr.mxu0 0.0
        %1441 = vmatpush1.msra.mxu0 %v1416
        %1442 = vmatprep.subr.mxu0 0.0
        %1443 = vmatpush1.msra.mxu0 %v1417
        %1444 = vmatprep.subr.mxu0 0.0
        %1445 = vmatpush1.msra.mxu0 %v1418
        %1446 = vmatprep.subr.mxu0 0.0
        %1447 = vmatpush1.msra.mxu0 %v1419
        %1448 = vmatprep.subr.mxu0 0.0
        %1449 = vmatpush1.msra.mxu0 %v1420
        %1450 = vmatprep.subr.mxu0 0.0
        %1451 = vmatpush1.msra.mxu0 %v1421
        %1452 = vmatprep.subr.mxu0 0.0
        %1453 = vmatpush1.msra.mxu0 %v1422
        %1454 = vmatprep.subr.mxu0 0.0
        %1455 = vmatpush1.msra.mxu0 %v1423
        %1456 = vmatprep.subr.mxu0 0.0
        %1457 = vmatpush1.msra.mxu0 0.0
        %1458 = vmatprep.subr.mxu0 0.0
        %1459 = vmatpush1.msra.mxu0 0.0
        %1460 = vmatprep.subr.mxu0 0.0
        %1461 = vmatpush1.msra.mxu0 0.0
        %1462 = vmatprep.subr.mxu0 0.0
        %1463 = vmatpush1.msra.mxu0 0.0
        %1464 = vmatprep.subr.mxu0 0.0
        %1465 = vmatpush1.msra.mxu0 0.0
        %1466 = vmatprep.subr.mxu0 0.0
        %1467 = vmatpush1.msra.mxu0 0.0
        %1468 = vmatprep.subr.mxu0 0.0
        %1469 = vmatpush1.msra.mxu0 0.0
        %1470 = vmatprep.subr.mxu0 0.0
        %1471 = vmatpush1.msra.mxu0 0.0
        %1472 = vmatprep.subr.mxu0 0.0
        %1473 = vmatpush1.msra.mxu0 0.0
        %1474 = vmatprep.subr.mxu0 0.0
        %1475 = vmatpush1.msra.mxu0 0.0
        %1476 = vmatprep.subr.mxu0 0.0
        %1477 = vmatpush1.msra.mxu0 0.0
        %1478 = vmatprep.subr.mxu0 0.0
        %1479 = vmatpush1.msra.mxu0 0.0
        %1480 = vmatprep.subr.mxu0 0.0
        %1481 = vmatpush1.msra.mxu0 0.0
        %1482 = vmatprep.subr.mxu0 0.0
        %1483 = vmatpush1.msra.mxu0 0.0
        %1484 = vmatprep.subr.mxu0 0.0
        %1485 = vmatpush1.msra.mxu0 0.0
        %1486 = vmatprep.subr.mxu0 0.0
        %1487 = vmatpush1.msra.mxu0 0.0
        %1488 = vmatprep.mubr.f32.mxu0 0.0
        %1489 = vmatmul.mubr.f32.gmra.mrb[0].mxu0 %v1406
        %v1490 = vpop.f32.mrb[0].mxu0
        %v1491 = vadd.f32 0.0, %v1490
        %v1492 = vpop.f32.mrb[0].mxu0
        %1493 = vdwg.mxu0
        %v1494 = vadd.f32 %v1400, %v1491
        %s1495 = scalar_lea.vmem [#allocation2], 3
        %v1496 = vld [vmem:[%s1495] ss:$8 sm:$0xf]
        %v1497 = vld [vmem:[%s1495] ss:$8 sm:$0xf0]
        %v1498 = vor.u32 %v1496, %v1497
        %s1499 = scalar_lea.vmem [#allocation9], 384
        %v1500 = vld [vmem:[%s1499] sm:$0xff]
        %v1501 = vld [vmem:[%s1499 + $0x8] sm:$0xff]
        %v1502 = vld [vmem:[%s1499 + $0x10] sm:$0xff]
        %v1503 = vld [vmem:[%s1499 + $0x18] sm:$0xff]
        %v1504 = vld [vmem:[%s1499 + $0x20] sm:$0xff]
        %v1505 = vld [vmem:[%s1499 + $0x28] sm:$0xff]
        %v1506 = vld [vmem:[%s1499 + $0x30] sm:$0xff]
        %v1507 = vld [vmem:[%s1499 + $0x38] sm:$0xff]
        %v1508 = vld [vmem:[%s1499 + $0x40] sm:$0xff]
        %v1509 = vld [vmem:[%s1499 + $0x48] sm:$0xff]
        %v1510 = vld [vmem:[%s1499 + $0x50] sm:$0xff]
        %v1511 = vld [vmem:[%s1499 + $0x58] sm:$0xff]
        %v1512 = vld [vmem:[%s1499 + $0x60] sm:$0xff]
        %v1513 = vld [vmem:[%s1499 + $0x68] sm:$0xff]
        %v1514 = vld [vmem:[%s1499 + $0x70] sm:$0xff]
        %v1515 = vld [vmem:[%s1499 + $0x78] sm:$0xff]
        %1516 = vmatprep.subr.mxu0 0.0
        %1517 = vmatpush1.msra.mxu0 %v1500
        %1518 = vmatprep.subr.mxu0 0.0
        %1519 = vmatpush1.msra.mxu0 %v1501
        %1520 = vmatprep.subr.mxu0 0.0
        %1521 = vmatpush1.msra.mxu0 %v1502
        %1522 = vmatprep.subr.mxu0 0.0
        %1523 = vmatpush1.msra.mxu0 %v1503
        %1524 = vmatprep.subr.mxu0 0.0
        %1525 = vmatpush1.msra.mxu0 %v1504
        %1526 = vmatprep.subr.mxu0 0.0
        %1527 = vmatpush1.msra.mxu0 %v1505
        %1528 = vmatprep.subr.mxu0 0.0
        %1529 = vmatpush1.msra.mxu0 %v1506
        %1530 = vmatprep.subr.mxu0 0.0
        %1531 = vmatpush1.msra.mxu0 %v1507
        %1532 = vmatprep.subr.mxu0 0.0
        %1533 = vmatpush1.msra.mxu0 %v1508
        %1534 = vmatprep.subr.mxu0 0.0
        %1535 = vmatpush1.msra.mxu0 %v1509
        %1536 = vmatprep.subr.mxu0 0.0
        %1537 = vmatpush1.msra.mxu0 %v1510
        %1538 = vmatprep.subr.mxu0 0.0
        %1539 = vmatpush1.msra.mxu0 %v1511
        %1540 = vmatprep.subr.mxu0 0.0
        %1541 = vmatpush1.msra.mxu0 %v1512
        %1542 = vmatprep.subr.mxu0 0.0
        %1543 = vmatpush1.msra.mxu0 %v1513
        %1544 = vmatprep.subr.mxu0 0.0
        %1545 = vmatpush1.msra.mxu0 %v1514
        %1546 = vmatprep.subr.mxu0 0.0
        %1547 = vmatpush1.msra.mxu0 %v1515
        %1548 = vmatprep.subr.mxu0 0.0
        %1549 = vmatpush1.msra.mxu0 0.0
        %1550 = vmatprep.subr.mxu0 0.0
        %1551 = vmatpush1.msra.mxu0 0.0
        %1552 = vmatprep.subr.mxu0 0.0
        %1553 = vmatpush1.msra.mxu0 0.0
        %1554 = vmatprep.subr.mxu0 0.0
        %1555 = vmatpush1.msra.mxu0 0.0
        %1556 = vmatprep.subr.mxu0 0.0
        %1557 = vmatpush1.msra.mxu0 0.0
        %1558 = vmatprep.subr.mxu0 0.0
        %1559 = vmatpush1.msra.mxu0 0.0
        %1560 = vmatprep.subr.mxu0 0.0
        %1561 = vmatpush1.msra.mxu0 0.0
        %1562 = vmatprep.subr.mxu0 0.0
        %1563 = vmatpush1.msra.mxu0 0.0
        %1564 = vmatprep.subr.mxu0 0.0
        %1565 = vmatpush1.msra.mxu0 0.0
        %1566 = vmatprep.subr.mxu0 0.0
        %1567 = vmatpush1.msra.mxu0 0.0
        %1568 = vmatprep.subr.mxu0 0.0
        %1569 = vmatpush1.msra.mxu0 0.0
        %1570 = vmatprep.subr.mxu0 0.0
        %1571 = vmatpush1.msra.mxu0 0.0
        %1572 = vmatprep.subr.mxu0 0.0
        %1573 = vmatpush1.msra.mxu0 0.0
        %1574 = vmatprep.subr.mxu0 0.0
        %1575 = vmatpush1.msra.mxu0 0.0
        %1576 = vmatprep.subr.mxu0 0.0
        %1577 = vmatpush1.msra.mxu0 0.0
        %1578 = vmatprep.subr.mxu0 0.0
        %1579 = vmatpush1.msra.mxu0 0.0
        %1580 = vmatprep.mubr.f32.mxu0 0.0
        %1581 = vmatmul.mubr.f32.gmra.mrb[0].mxu0 %v1498
        %v1582 = vpop.f32.mrb[0].mxu0
        %v1583 = vadd.f32 0.0, %v1582
        %v1584 = vpop.f32.mrb[0].mxu0
        %1585 = vdwg.mxu0
        %v1586 = vadd.f32 %v1494, %v1583
        %s1587 = scalar_lea.vmem [#allocation2], 4
        %v1588 = vld [vmem:[%s1587] ss:$8 sm:$0xf]
        %v1589 = vld [vmem:[%s1587] ss:$8 sm:$0xf0]
        %v1590 = vor.u32 %v1588, %v1589
        %s1591 = scalar_lea.vmem [#allocation9], 512
        %v1592 = vld [vmem:[%s1591] sm:$0xff]
        %v1593 = vld [vmem:[%s1591 + $0x8] sm:$0xff]
        %v1594 = vld [vmem:[%s1591 + $0x10] sm:$0xff]
        %v1595 = vld [vmem:[%s1591 + $0x18] sm:$0xff]
        %v1596 = vld [vmem:[%s1591 + $0x20] sm:$0xff]
        %v1597 = vld [vmem:[%s1591 + $0x28] sm:$0xff]
        %v1598 = vld [vmem:[%s1591 + $0x30] sm:$0xff]
        %v1599 = vld [vmem:[%s1591 + $0x38] sm:$0xff]
        %v1600 = vld [vmem:[%s1591 + $0x40] sm:$0xff]
        %v1601 = vld [vmem:[%s1591 + $0x48] sm:$0xff]
        %v1602 = vld [vmem:[%s1591 + $0x50] sm:$0xff]
        %v1603 = vld [vmem:[%s1591 + $0x58] sm:$0xff]
        %v1604 = vld [vmem:[%s1591 + $0x60] sm:$0xff]
        %v1605 = vld [vmem:[%s1591 + $0x68] sm:$0xff]
        %v1606 = vld [vmem:[%s1591 + $0x70] sm:$0xff]
        %v1607 = vld [vmem:[%s1591 + $0x78] sm:$0xff]
        %1608 = vmatprep.subr.mxu0 0.0
        %1609 = vmatpush1.msra.mxu0 %v1592
        %1610 = vmatprep.subr.mxu0 0.0
        %1611 = vmatpush1.msra.mxu0 %v1593
        %1612 = vmatprep.subr.mxu0 0.0
        %1613 = vmatpush1.msra.mxu0 %v1594
        %1614 = vmatprep.subr.mxu0 0.0
        %1615 = vmatpush1.msra.mxu0 %v1595
        %1616 = vmatprep.subr.mxu0 0.0
        %1617 = vmatpush1.msra.mxu0 %v1596
        %1618 = vmatprep.subr.mxu0 0.0
        %1619 = vmatpush1.msra.mxu0 %v1597
        %1620 = vmatprep.subr.mxu0 0.0
        %1621 = vmatpush1.msra.mxu0 %v1598
        %1622 = vmatprep.subr.mxu0 0.0
        %1623 = vmatpush1.msra.mxu0 %v1599
        %1624 = vmatprep.subr.mxu0 0.0
        %1625 = vmatpush1.msra.mxu0 %v1600
        %1626 = vmatprep.subr.mxu0 0.0
        %1627 = vmatpush1.msra.mxu0 %v1601
        %1628 = vmatprep.subr.mxu0 0.0
        %1629 = vmatpush1.msra.mxu0 %v1602
        %1630 = vmatprep.subr.mxu0 0.0
        %1631 = vmatpush1.msra.mxu0 %v1603
        %1632 = vmatprep.subr.mxu0 0.0
        %1633 = vmatpush1.msra.mxu0 %v1604
        %1634 = vmatprep.subr.mxu0 0.0
        %1635 = vmatpush1.msra.mxu0 %v1605
        %1636 = vmatprep.subr.mxu0 0.0
        %1637 = vmatpush1.msra.mxu0 %v1606
        %1638 = vmatprep.subr.mxu0 0.0
        %1639 = vmatpush1.msra.mxu0 %v1607
        %1640 = vmatprep.subr.mxu0 0.0
        %1641 = vmatpush1.msra.mxu0 0.0
        %1642 = vmatprep.subr.mxu0 0.0
        %1643 = vmatpush1.msra.mxu0 0.0
        %1644 = vmatprep.subr.mxu0 0.0
        %1645 = vmatpush1.msra.mxu0 0.0
        %1646 = vmatprep.subr.mxu0 0.0
        %1647 = vmatpush1.msra.mxu0 0.0
        %1648 = vmatprep.subr.mxu0 0.0
        %1649 = vmatpush1.msra.mxu0 0.0
        %1650 = vmatprep.subr.mxu0 0.0
        %1651 = vmatpush1.msra.mxu0 0.0
        %1652 = vmatprep.subr.mxu0 0.0
        %1653 = vmatpush1.msra.mxu0 0.0
        %1654 = vmatprep.subr.mxu0 0.0
        %1655 = vmatpush1.msra.mxu0 0.0
        %1656 = vmatprep.subr.mxu0 0.0
        %1657 = vmatpush1.msra.mxu0 0.0
        %1658 = vmatprep.subr.mxu0 0.0
        %1659 = vmatpush1.msra.mxu0 0.0
        %1660 = vmatprep.subr.mxu0 0.0
        %1661 = vmatpush1.msra.mxu0 0.0
        %1662 = vmatprep.subr.mxu0 0.0
        %1663 = vmatpush1.msra.mxu0 0.0
        %1664 = vmatprep.subr.mxu0 0.0
        %1665 = vmatpush1.msra.mxu0 0.0
        %1666 = vmatprep.subr.mxu0 0.0
        %1667 = vmatpush1.msra.mxu0 0.0
        %1668 = vmatprep.subr.mxu0 0.0
        %1669 = vmatpush1.msra.mxu0 0.0
        %1670 = vmatprep.subr.mxu0 0.0
        %1671 = vmatpush1.msra.mxu0 0.0
        %1672 = vmatprep.mubr.f32.mxu0 0.0
        %1673 = vmatmul.mubr.f32.gmra.mrb[0].mxu0 %v1590
        %v1674 = vpop.f32.mrb[0].mxu0
        %v1675 = vadd.f32 0.0, %v1674
        %v1676 = vpop.f32.mrb[0].mxu0
        %1677 = vdwg.mxu0
        %v1678 = vadd.f32 %v1586, %v1675
        %s1679 = scalar_lea.vmem [#allocation2], 5
        %v1680 = vld [vmem:[%s1679] ss:$8 sm:$0xf]
        %v1681 = vld [vmem:[%s1679] ss:$8 sm:$0xf0]
        %v1682 = vor.u32 %v1680, %v1681
        %s1683 = scalar_lea.vmem [#allocation9], 640
        %v1684 = vld [vmem:[%s1683] sm:$0xff]
        %v1685 = vld [vmem:[%s1683 + $0x8] sm:$0xff]
        %v1686 = vld [vmem:[%s1683 + $0x10] sm:$0xff]
        %v1687 = vld [vmem:[%s1683 + $0x18] sm:$0xff]
        %v1688 = vld [vmem:[%s1683 + $0x20] sm:$0xff]
        %v1689 = vld [vmem:[%s1683 + $0x28] sm:$0xff]
        %v1690 = vld [vmem:[%s1683 + $0x30] sm:$0xff]
        %v1691 = vld [vmem:[%s1683 + $0x38] sm:$0xff]
        %v1692 = vld [vmem:[%s1683 + $0x40] sm:$0xff]
        %v1693 = vld [vmem:[%s1683 + $0x48] sm:$0xff]
        %v1694 = vld [vmem:[%s1683 + $0x50] sm:$0xff]
        %v1695 = vld [vmem:[%s1683 + $0x58] sm:$0xff]
        %v1696 = vld [vmem:[%s1683 + $0x60] sm:$0xff]
        %v1697 = vld [vmem:[%s1683 + $0x68] sm:$0xff]
        %v1698 = vld [vmem:[%s1683 + $0x70] sm:$0xff]
        %v1699 = vld [vmem:[%s1683 + $0x78] sm:$0xff]
        %1700 = vmatprep.subr.mxu0 0.0
        %1701 = vmatpush1.msra.mxu0 %v1684
        %1702 = vmatprep.subr.mxu0 0.0
        %1703 = vmatpush1.msra.mxu0 %v1685
        %1704 = vmatprep.subr.mxu0 0.0
        %1705 = vmatpush1.msra.mxu0 %v1686
        %1706 = vmatprep.subr.mxu0 0.0
        %1707 = vmatpush1.msra.mxu0 %v1687
        %1708 = vmatprep.subr.mxu0 0.0
        %1709 = vmatpush1.msra.mxu0 %v1688
        %1710 = vmatprep.subr.mxu0 0.0
        %1711 = vmatpush1.msra.mxu0 %v1689
        %1712 = vmatprep.subr.mxu0 0.0
        %1713 = vmatpush1.msra.mxu0 %v1690
        %1714 = vmatprep.subr.mxu0 0.0
        %1715 = vmatpush1.msra.mxu0 %v1691
        %1716 = vmatprep.subr.mxu0 0.0
        %1717 = vmatpush1.msra.mxu0 %v1692
        %1718 = vmatprep.subr.mxu0 0.0
        %1719 = vmatpush1.msra.mxu0 %v1693
        %1720 = vmatprep.subr.mxu0 0.0
        %1721 = vmatpush1.msra.mxu0 %v1694
        %1722 = vmatprep.subr.mxu0 0.0
        %1723 = vmatpush1.msra.mxu0 %v1695
        %1724 = vmatprep.subr.mxu0 0.0
        %1725 = vmatpush1.msra.mxu0 %v1696
        %1726 = vmatprep.subr.mxu0 0.0
        %1727 = vmatpush1.msra.mxu0 %v1697
        %1728 = vmatprep.subr.mxu0 0.0
        %1729 = vmatpush1.msra.mxu0 %v1698
        %1730 = vmatprep.subr.mxu0 0.0
        %1731 = vmatpush1.msra.mxu0 %v1699
        %1732 = vmatprep.subr.mxu0 0.0
        %1733 = vmatpush1.msra.mxu0 0.0
        %1734 = vmatprep.subr.mxu0 0.0
        %1735 = vmatpush1.msra.mxu0 0.0
        %1736 = vmatprep.subr.mxu0 0.0
        %1737 = vmatpush1.msra.mxu0 0.0
        %1738 = vmatprep.subr.mxu0 0.0
        %1739 = vmatpush1.msra.mxu0 0.0
        %1740 = vmatprep.subr.mxu0 0.0
        %1741 = vmatpush1.msra.mxu0 0.0
        %1742 = vmatprep.subr.mxu0 0.0
        %1743 = vmatpush1.msra.mxu0 0.0
        %1744 = vmatprep.subr.mxu0 0.0
        %1745 = vmatpush1.msra.mxu0 0.0
        %1746 = vmatprep.subr.mxu0 0.0
        %1747 = vmatpush1.msra.mxu0 0.0
        %1748 = vmatprep.subr.mxu0 0.0
        %1749 = vmatpush1.msra.mxu0 0.0
        %1750 = vmatprep.subr.mxu0 0.0
        %1751 = vmatpush1.msra.mxu0 0.0
        %1752 = vmatprep.subr.mxu0 0.0
        %1753 = vmatpush1.msra.mxu0 0.0
        %1754 = vmatprep.subr.mxu0 0.0
        %1755 = vmatpush1.msra.mxu0 0.0
        %1756 = vmatprep.subr.mxu0 0.0
        %1757 = vmatpush1.msra.mxu0 0.0
        %1758 = vmatprep.subr.mxu0 0.0
        %1759 = vmatpush1.msra.mxu0 0.0
        %1760 = vmatprep.subr.mxu0 0.0
        %1761 = vmatpush1.msra.mxu0 0.0
        %1762 = vmatprep.subr.mxu0 0.0
        %1763 = vmatpush1.msra.mxu0 0.0
        %1764 = vmatprep.mubr.f32.mxu0 0.0
        %1765 = vmatmul.mubr.f32.gmra.mrb[0].mxu0 %v1682
        %v1766 = vpop.f32.mrb[0].mxu0
        %v1767 = vadd.f32 0.0, %v1766
        %v1768 = vpop.f32.mrb[0].mxu0
        %1769 = vdwg.mxu0
        %v1770 = vadd.f32 %v1678, %v1767
        %s1771 = scalar_lea.vmem [#allocation2], 6
        %v1772 = vld [vmem:[%s1771] ss:$8 sm:$0xf]
        %v1773 = vld [vmem:[%s1771] ss:$8 sm:$0xf0]
        %v1774 = vor.u32 %v1772, %v1773
        %s1775 = scalar_lea.vmem [#allocation9], 768
        %v1776 = vld [vmem:[%s1775] sm:$0xff]
        %v1777 = vld [vmem:[%s1775 + $0x8] sm:$0xff]
        %v1778 = vld [vmem:[%s1775 + $0x10] sm:$0xff]
        %v1779 = vld [vmem:[%s1775 + $0x18] sm:$0xff]
        %v1780 = vld [vmem:[%s1775 + $0x20] sm:$0xff]
        %v1781 = vld [vmem:[%s1775 + $0x28] sm:$0xff]
        %v1782 = vld [vmem:[%s1775 + $0x30] sm:$0xff]
        %v1783 = vld [vmem:[%s1775 + $0x38] sm:$0xff]
        %v1784 = vld [vmem:[%s1775 + $0x40] sm:$0xff]
        %v1785 = vld [vmem:[%s1775 + $0x48] sm:$0xff]
        %v1786 = vld [vmem:[%s1775 + $0x50] sm:$0xff]
        %v1787 = vld [vmem:[%s1775 + $0x58] sm:$0xff]
        %v1788 = vld [vmem:[%s1775 + $0x60] sm:$0xff]
        %v1789 = vld [vmem:[%s1775 + $0x68] sm:$0xff]
        %v1790 = vld [vmem:[%s1775 + $0x70] sm:$0xff]
        %v1791 = vld [vmem:[%s1775 + $0x78] sm:$0xff]
        %1792 = vmatprep.subr.mxu0 0.0
        %1793 = vmatpush1.msra.mxu0 %v1776
        %1794 = vmatprep.subr.mxu0 0.0
        %1795 = vmatpush1.msra.mxu0 %v1777
        %1796 = vmatprep.subr.mxu0 0.0
        %1797 = vmatpush1.msra.mxu0 %v1778
        %1798 = vmatprep.subr.mxu0 0.0
        %1799 = vmatpush1.msra.mxu0 %v1779
        %1800 = vmatprep.subr.mxu0 0.0
        %1801 = vmatpush1.msra.mxu0 %v1780
        %1802 = vmatprep.subr.mxu0 0.0
        %1803 = vmatpush1.msra.mxu0 %v1781
        %1804 = vmatprep.subr.mxu0 0.0
        %1805 = vmatpush1.msra.mxu0 %v1782
        %1806 = vmatprep.subr.mxu0 0.0
        %1807 = vmatpush1.msra.mxu0 %v1783
        %1808 = vmatprep.subr.mxu0 0.0
        %1809 = vmatpush1.msra.mxu0 %v1784
        %1810 = vmatprep.subr.mxu0 0.0
        %1811 = vmatpush1.msra.mxu0 %v1785
        %1812 = vmatprep.subr.mxu0 0.0
        %1813 = vmatpush1.msra.mxu0 %v1786
        %1814 = vmatprep.subr.mxu0 0.0
        %1815 = vmatpush1.msra.mxu0 %v1787
        %1816 = vmatprep.subr.mxu0 0.0
        %1817 = vmatpush1.msra.mxu0 %v1788
        %1818 = vmatprep.subr.mxu0 0.0
        %1819 = vmatpush1.msra.mxu0 %v1789
        %1820 = vmatprep.subr.mxu0 0.0
        %1821 = vmatpush1.msra.mxu0 %v1790
        %1822 = vmatprep.subr.mxu0 0.0
        %1823 = vmatpush1.msra.mxu0 %v1791
        %1824 = vmatprep.subr.mxu0 0.0
        %1825 = vmatpush1.msra.mxu0 0.0
        %1826 = vmatprep.subr.mxu0 0.0
        %1827 = vmatpush1.msra.mxu0 0.0
        %1828 = vmatprep.subr.mxu0 0.0
        %1829 = vmatpush1.msra.mxu0 0.0
        %1830 = vmatprep.subr.mxu0 0.0
        %1831 = vmatpush1.msra.mxu0 0.0
        %1832 = vmatprep.subr.mxu0 0.0
        %1833 = vmatpush1.msra.mxu0 0.0
        %1834 = vmatprep.subr.mxu0 0.0
        %1835 = vmatpush1.msra.mxu0 0.0
        %1836 = vmatprep.subr.mxu0 0.0
        %1837 = vmatpush1.msra.mxu0 0.0
        %1838 = vmatprep.subr.mxu0 0.0
        %1839 = vmatpush1.msra.mxu0 0.0
        %1840 = vmatprep.subr.mxu0 0.0
        %1841 = vmatpush1.msra.mxu0 0.0
        %1842 = vmatprep.subr.mxu0 0.0
        %1843 = vmatpush1.msra.mxu0 0.0
        %1844 = vmatprep.subr.mxu0 0.0
        %1845 = vmatpush1.msra.mxu0 0.0
        %1846 = vmatprep.subr.mxu0 0.0
        %1847 = vmatpush1.msra.mxu0 0.0
        %1848 = vmatprep.subr.mxu0 0.0
        %1849 = vmatpush1.msra.mxu0 0.0
        %1850 = vmatprep.subr.mxu0 0.0
        %1851 = vmatpush1.msra.mxu0 0.0
        %1852 = vmatprep.subr.mxu0 0.0
        %1853 = vmatpush1.msra.mxu0 0.0
        %1854 = vmatprep.subr.mxu0 0.0
        %1855 = vmatpush1.msra.mxu0 0.0
        %1856 = vmatprep.mubr.f32.mxu0 0.0
        %1857 = vmatmul.mubr.f32.gmra.mrb[0].mxu0 %v1774
        %v1858 = vpop.f32.mrb[0].mxu0
        %v1859 = vadd.f32 0.0, %v1858
        %v1860 = vpop.f32.mrb[0].mxu0
        %1861 = vdwg.mxu0
        %v1862 = vadd.f32 %v1770, %v1859
        %s1863 = scalar_lea.vmem [#allocation2], 7
        %v1864 = vld [vmem:[%s1863] ss:$8 sm:$0xf]
        %v1865 = vld [vmem:[%s1863] ss:$8 sm:$0xf0]
        %v1866 = vor.u32 %v1864, %v1865
        %s1867 = scalar_lea.vmem [#allocation9], 896
        %v1868 = vld [vmem:[%s1867] sm:$0xff]
        %v1869 = vld [vmem:[%s1867 + $0x8] sm:$0xff]
        %v1870 = vld [vmem:[%s1867 + $0x10] sm:$0xff]
        %v1871 = vld [vmem:[%s1867 + $0x18] sm:$0xff]
        %v1872 = vld [vmem:[%s1867 + $0x20] sm:$0xff]
        %v1873 = vld [vmem:[%s1867 + $0x28] sm:$0xff]
        %v1874 = vld [vmem:[%s1867 + $0x30] sm:$0xff]
        %v1875 = vld [vmem:[%s1867 + $0x38] sm:$0xff]
        %v1876 = vld [vmem:[%s1867 + $0x40] sm:$0xff]
        %v1877 = vld [vmem:[%s1867 + $0x48] sm:$0xff]
        %v1878 = vld [vmem:[%s1867 + $0x50] sm:$0xff]
        %v1879 = vld [vmem:[%s1867 + $0x58] sm:$0xff]
        %v1880 = vld [vmem:[%s1867 + $0x60] sm:$0xff]
        %v1881 = vld [vmem:[%s1867 + $0x68] sm:$0xff]
        %v1882 = vld [vmem:[%s1867 + $0x70] sm:$0xff]
        %v1883 = vld [vmem:[%s1867 + $0x78] sm:$0xff]
        %1884 = vmatprep.subr.mxu0 0.0
        %1885 = vmatpush1.msra.mxu0 %v1868
        %1886 = vmatprep.subr.mxu0 0.0
        %1887 = vmatpush1.msra.mxu0 %v1869
        %1888 = vmatprep.subr.mxu0 0.0
        %1889 = vmatpush1.msra.mxu0 %v1870
        %1890 = vmatprep.subr.mxu0 0.0
        %1891 = vmatpush1.msra.mxu0 %v1871
        %1892 = vmatprep.subr.mxu0 0.0
        %1893 = vmatpush1.msra.mxu0 %v1872
        %1894 = vmatprep.subr.mxu0 0.0
        %1895 = vmatpush1.msra.mxu0 %v1873
        %1896 = vmatprep.subr.mxu0 0.0
        %1897 = vmatpush1.msra.mxu0 %v1874
        %1898 = vmatprep.subr.mxu0 0.0
        %1899 = vmatpush1.msra.mxu0 %v1875
        %1900 = vmatprep.subr.mxu0 0.0
        %1901 = vmatpush1.msra.mxu0 %v1876
        %1902 = vmatprep.subr.mxu0 0.0
        %1903 = vmatpush1.msra.mxu0 %v1877
        %1904 = vmatprep.subr.mxu0 0.0
        %1905 = vmatpush1.msra.mxu0 %v1878
        %1906 = vmatprep.subr.mxu0 0.0
        %1907 = vmatpush1.msra.mxu0 %v1879
        %1908 = vmatprep.subr.mxu0 0.0
        %1909 = vmatpush1.msra.mxu0 %v1880
        %1910 = vmatprep.subr.mxu0 0.0
        %1911 = vmatpush1.msra.mxu0 %v1881
        %1912 = vmatprep.subr.mxu0 0.0
        %1913 = vmatpush1.msra.mxu0 %v1882
        %1914 = vmatprep.subr.mxu0 0.0
        %1915 = vmatpush1.msra.mxu0 %v1883
        %1916 = vmatprep.subr.mxu0 0.0
        %1917 = vmatpush1.msra.mxu0 0.0
        %1918 = vmatprep.subr.mxu0 0.0
        %1919 = vmatpush1.msra.mxu0 0.0
        %1920 = vmatprep.subr.mxu0 0.0
        %1921 = vmatpush1.msra.mxu0 0.0
        %1922 = vmatprep.subr.mxu0 0.0
        %1923 = vmatpush1.msra.mxu0 0.0
        %1924 = vmatprep.subr.mxu0 0.0
        %1925 = vmatpush1.msra.mxu0 0.0
        %1926 = vmatprep.subr.mxu0 0.0
        %1927 = vmatpush1.msra.mxu0 0.0
        %1928 = vmatprep.subr.mxu0 0.0
        %1929 = vmatpush1.msra.mxu0 0.0
        %1930 = vmatprep.subr.mxu0 0.0
        %1931 = vmatpush1.msra.mxu0 0.0
        %1932 = vmatprep.subr.mxu0 0.0
        %1933 = vmatpush1.msra.mxu0 0.0
        %1934 = vmatprep.subr.mxu0 0.0
        %1935 = vmatpush1.msra.mxu0 0.0
        %1936 = vmatprep.subr.mxu0 0.0
        %1937 = vmatpush1.msra.mxu0 0.0
        %1938 = vmatprep.subr.mxu0 0.0
        %1939 = vmatpush1.msra.mxu0 0.0
        %1940 = vmatprep.subr.mxu0 0.0
        %1941 = vmatpush1.msra.mxu0 0.0
        %1942 = vmatprep.subr.mxu0 0.0
        %1943 = vmatpush1.msra.mxu0 0.0
        %1944 = vmatprep.subr.mxu0 0.0
        %1945 = vmatpush1.msra.mxu0 0.0
        %1946 = vmatprep.subr.mxu0 0.0
        %1947 = vmatpush1.msra.mxu0 0.0
        %1948 = vmatprep.mubr.f32.mxu0 0.0
        %1949 = vmatmul.mubr.f32.gmra.mrb[0].mxu0 %v1866
        %v1950 = vpop.f32.mrb[0].mxu0
        %v1951 = vadd.f32 0.0, %v1950
        %v1952 = vpop.f32.mrb[0].mxu0
        %1953 = vdwg.mxu0
        %v1954 = vadd.f32 %v1862, %v1951
        %v1955 = vld [vmem:[%s8] sm:$0x1]
        %v1957 = vlaneseq
        %v1958 = vshrl.u32 %v1957, 7
        %v1959 = vsub.s32 0, %v1958
        %v1960 = vrot.slane %v1955, %v1959
        %v1962 = vadd.f32 %v1954, %v1960
        %1963 = vst [vmem:[%s385] sm:$0xff] %v1962
        %s1964 = sand.u32 %s228, 1
        %s1965 = scalar_lea.sflag [#allocation5], %s1964
        %s1966 = sand.u32 %s228, 1
        %s1967 = smul.addr %s1966, 8
        %s1968 = scalar_lea.vmem [#allocation11], %s1967
        // Predicated region
        $region73: #{tpu_custom_call.1} parent=55 // pred_check
          %p1969 = pneg %p238
        $region74: #{tpu_custom_call.1} parent=55 // pred_check_branch
          %1971 = sbr.rel (%p1969) target = $region76
        $region75: #{tpu_custom_call.1} parent=55 // pred_region
          %s1973 = ssub.s32 128, 128
          %1974 = vsyncadd %s1965, %s1973
          %s1975 = smul.addr %s26, 128
          %s1976 = scalar_lea.hbm %s9, %s1975
          %s1978 = sshll.u32 %s1968, 4
          %s1979 = int_to_ptr.vmem [resolvable:$true] %s1978
          %1981 = dma.vmem_to_hbm [thread:$0]  %s1979, 128, %s1976, %s1965
        $region76: #{tpu_custom_call.1} parent=55 // pred_fallthru
          _
      $region56: #{tpu_custom_call.1} parent=5 // pred_fallthru
        _
      %p1982 = scmp.le.s32.totalorder 2, %s21
      // Predicated region
      $region77: #{tpu_custom_call.1} parent=5 // pred_check
        %p1983 = pneg %p1982
      $region78: #{tpu_custom_call.1} parent=5 // pred_check_branch
        %1985 = sbr.rel (%p1983) target = $region80
      $region79: #{tpu_custom_call.1} parent=5 // pred_region
        %s1986 = ssub.s32 %s21, 2
        // Predicated region
        $region81: #{tpu_custom_call.1} parent=79 // pred_check
          %p1987 = pneg %p244
        $region82: #{tpu_custom_call.1} parent=79 // pred_check_branch
          %1989 = sbr.rel (%p1987) target = $region84
        $region83: #{tpu_custom_call.1} parent=79 // pred_region
          %s1990 = sand.u32 %s229, 1
          %s1991 = scalar_lea.sflag [#allocation5], %s1990
          %s1992 = sand.u32 %s229, 1
          %s1993 = smul.addr %s1992, 8
          %s1994 = scalar_lea.vmem [#allocation11], %s1993
          %1995 = dma.done %s1991, 128
        $region84: #{tpu_custom_call.1} parent=79 // pred_fallthru
          _
      $region80: #{tpu_custom_call.1} parent=5 // pred_fallthru
        _
    $region6: #{tpu_custom_call.1} parent=1 // loop_footer
      %s25 = sadd.s32 1, %s21
    $region7: #{tpu_custom_call.1} parent=1 // loop_footer_branch
      %20 = sbr.rel target = $region3
    $region8: #{tpu_custom_call.1} parent=1 // loop_exit
      _
    %1996 = vsyncpa [#allocation4], 1
    %s1997 = scalar_lea.sflag [#allocation4], 1
    %1998 = vsyncpa %s1997, 1
    %1999 = vsyncpa [#allocation7], 1
    %2000 = vsyncpa [#allocation10], 1
    %2001 = vsyncpa [#allocation5], 1
    %s2002 = scalar_lea.sflag [#allocation5], 1
    %2003 = vsyncpa %s2002, 1

</llo_original>
